<compile_context>
chip_gen: v5e
topology: v5e:2x2
jax: 0.10.0
libtpu: 0.0.40
codegen_flags: <defaults>
</compile_context>

<pallas_src>
import jax
import jax.numpy as jnp
from jax.experimental import pallas as pl
from jax.experimental.pallas import tpu as pltpu

D_IN = 768
D_HID = 384
ROW_TILE = 512          # row tile for large batches (85%+ of HBM roofline)
SINGLE_BLOCK_MAX = 128  # below this, one block; tiny batches are weight-DMA bound


def adapter_kernel(x_ref, w1_ref, w2_ref, o_ref):
    # x: [tm, 768] bf16, w1: [768, 384] bf16, w2: [384, 768] bf16
    h = jnp.dot(x_ref[...], w1_ref[...], preferred_element_type=jnp.float32)
    h = jnp.maximum(h, 0.0).astype(jnp.bfloat16)          # ReLU, bf16 for MXU
    y = jnp.dot(h, w2_ref[...], preferred_element_type=jnp.float32)
    o_ref[...] = jnp.maximum(y, 0.0).astype(o_ref.dtype)  # ReLU, store in out dtype


def adapter_forward(x, w1, w2):
    """x: [..., 768] -> [..., 768], same semantics as Adapter.forward."""
    orig_shape = x.shape
    out_dtype = x.dtype
    d_in = orig_shape[-1]
    d_hid = w1.shape[1]
    d_out = w2.shape[1]

    x2 = x.reshape(-1, d_in)
    B = x2.shape[0]

    # bf16 operands for the MXU; accumulation stays f32 inside the kernel.
    xb = x2.astype(jnp.bfloat16)
    w1b = w1.astype(jnp.bfloat16)
    w2b = w2.astype(jnp.bfloat16)

    if B <= SINGLE_BLOCK_MAX:
        # Tiny batch: one block, weight-DMA bound; tiling would only add overhead.
        tm = B
    else:
        # At least two row tiles (DMA/compute overlap + v7x two-core split),
        # capped at ROW_TILE, aligned to the 8-sublane granule.
        tm = min(ROW_TILE, pl.cdiv(B, 2))
        tm = max(8, ((tm + 7) // 8) * 8)

    grid = (pl.cdiv(B, tm),)

    flops = 2 * B * (d_in * d_hid + d_hid * d_out)
    bytes_accessed = (2 * (B * d_in + d_in * d_hid + d_hid * d_out)
                      + jnp.dtype(out_dtype).itemsize * B * d_out)

    out = pl.pallas_call(
        adapter_kernel,
        grid=grid,
        in_specs=[
            # Activations: one row tile per grid step (ragged last block masked).
            pl.BlockSpec((tm, d_in), lambda i: (i, 0)),
            # Weights: constant index_map -> resident in VMEM, single-buffered.
            pl.BlockSpec((d_in, d_hid), lambda i: (0, 0),
                         pipeline_mode=pl.Buffered(1)),
            pl.BlockSpec((d_hid, d_out), lambda i: (0, 0),
                         pipeline_mode=pl.Buffered(1)),
        ],
        out_specs=pl.BlockSpec((tm, d_out), lambda i: (i, 0)),
        out_shape=jax.ShapeDtypeStruct((B, d_out), out_dtype),
        compiler_params=pltpu.CompilerParams(
            dimension_semantics=("parallel",)),
        cost_estimate=pl.CostEstimate(
            flops=flops, transcendentals=0, bytes_accessed=int(bytes_accessed)),
    )(xb, w1b, w2b)

    return out.reshape(orig_shape[:-1] + (d_out,))


def init_params(key):
    k1, k2 = jax.random.split(key)
    # Kaiming-uniform-ish scaling, matching nn.Linear defaults closely enough.
    w1 = jax.random.uniform(k1, (D_IN, D_HID), jnp.float32,
                            -1.0 / (D_IN ** 0.5), 1.0 / (D_IN ** 0.5))
    w2 = jax.random.uniform(k2, (D_HID, D_IN), jnp.float32,
                            -1.0 / (D_HID ** 0.5), 1.0 / (D_HID ** 0.5))
    return w1, w2


def adapter_ref(x, w1, w2):
    h = jnp.maximum(x @ w1, 0.0)
    return jnp.maximum(h @ w2, 0.0)


if __name__ == "__main__":
    key = jax.random.PRNGKey(0)
    kx, kw = jax.random.split(key)
    w1, w2 = init_params(kw)

    # Small batch of feature vectors with the module's fixed width (768).
    x = jax.random.normal(kx, (8, D_IN), jnp.float32)

    out = jax.block_until_ready(adapter_forward(x, w1, w2))
    ref = adapter_ref(x, w1, w2)

    assert out.shape == (8, D_IN)
    assert out.dtype == x.dtype
    assert bool(jnp.all(jnp.isfinite(out)))
    # bf16 matmul inputs -> loosened tolerance vs the f32 reference.
    assert bool(jnp.allclose(out, ref, atol=5e-2, rtol=5e-2))
    print("KERNEL_OK")
</pallas_src>

<mosaic_0001>
module attributes {stable_mosaic.version = 11 : i64} {
  func.func @adapter_kernel(%arg0: i32, %arg1: memref<8x768xbf16, #tpu.memory_space<vmem>>, %arg2: memref<768x384xbf16, #tpu.memory_space<vmem>>, %arg3: memref<384x768xbf16, #tpu.memory_space<vmem>>, %arg4: memref<8x768xf32, #tpu.memory_space<vmem>>) attributes {dimension_semantics = [#tpu.dimension_semantics<parallel>], iteration_bounds = array<i64: 1>, scalar_prefetch = 0 : i64, scratch_operands = 0 : i64, tpu.core_type = #tpu.core_type<tc>, window_params = [{transform_indices = @transform_0, window_bounds = array<i64: 8, 768>}, {pipeline_mode = #tpu.pipeline_mode<synchronous>, transform_indices = @transform_1, window_bounds = array<i64: 768, 384>}, {pipeline_mode = #tpu.pipeline_mode<synchronous>, transform_indices = @transform_2, window_bounds = array<i64: 384, 768>}, {transform_indices = @transform_3, window_bounds = array<i64: 8, 768>}]} {
    %c0 = arith.constant 0 : index
    %c0_0 = arith.constant 0 : index
    %0 = vector.load %arg1[%c0, %c0_0] : memref<8x768xbf16, #tpu.memory_space<vmem>>, vector<8x768xbf16>
    %c0_1 = arith.constant 0 : index
    %c0_2 = arith.constant 0 : index
    %1 = vector.load %arg2[%c0_1, %c0_2] : memref<768x384xbf16, #tpu.memory_space<vmem>>, vector<768x384xbf16>
    %cst = arith.constant dense<0.000000e+00> : vector<8x384xf32>
    %2 = tpu.matmul %0, %1, %cst {dimension_numbers = #tpu.dot_dimension_numbers<[1], [0], [0], [1], [0, 0, 1, 1], [], []>} : vector<8x768xbf16>, vector<768x384xbf16>, vector<8x384xf32> -> vector<8x384xf32>
    %cst_3 = arith.constant 0.000000e+00 : f32
    %3 = vector.broadcast %cst_3 : f32 to vector<8x384xf32>
    %4 = arith.maximumf %2, %3 : vector<8x384xf32>
    %5 = arith.truncf %4 : vector<8x384xf32> to vector<8x384xbf16>
    %c0_4 = arith.constant 0 : index
    %c0_5 = arith.constant 0 : index
    %6 = vector.load %arg3[%c0_4, %c0_5] : memref<384x768xbf16, #tpu.memory_space<vmem>>, vector<384x768xbf16>
    %cst_6 = arith.constant dense<0.000000e+00> : vector<8x768xf32>
    %7 = tpu.matmul %5, %6, %cst_6 {dimension_numbers = #tpu.dot_dimension_numbers<[1], [0], [0], [1], [0, 0, 1, 1], [], []>} : vector<8x384xbf16>, vector<384x768xbf16>, vector<8x768xf32> -> vector<8x768xf32>
    %cst_7 = arith.constant 0.000000e+00 : f32
    %8 = vector.broadcast %cst_7 : f32 to vector<8x768xf32>
    %9 = arith.maximumf %7, %8 : vector<8x768xf32>
    %c0_8 = arith.constant 0 : index
    %c0_9 = arith.constant 0 : index
    %10 = vector.load %arg4[%c0_8, %c0_9] : memref<8x768xf32, #tpu.memory_space<vmem>>, vector<8x768xf32>
    tpu.vector_store %arg4[%c0_8, %c0_9], %9 {strides = array<i32>} : memref<8x768xf32, #tpu.memory_space<vmem>>, vector<8x768xf32>,
    return
  }
  func.func @transform_0(%arg0: i32) -> (i32, i32) {
    %c0_i32 = arith.constant 0 : i32
    %c0_i32_0 = arith.constant 0 : i32
    return %arg0, %c0_i32 : i32, i32
  }
  func.func @transform_1(%arg0: i32) -> (i32, i32) {
    %c0_i32 = arith.constant 0 : i32
    %c0_i32_0 = arith.constant 0 : i32
    %c0_i32_1 = arith.constant 0 : i32
    return %c0_i32, %c0_i32_0 : i32, i32
  }
  func.func @transform_2(%arg0: i32) -> (i32, i32) {
    %c0_i32 = arith.constant 0 : i32
    %c0_i32_0 = arith.constant 0 : i32
    %c0_i32_1 = arith.constant 0 : i32
    return %c0_i32, %c0_i32_0 : i32, i32
  }
  func.func @transform_3(%arg0: i32) -> (i32, i32) {
    %c0_i32 = arith.constant 0 : i32
    %c0_i32_0 = arith.constant 0 : i32
    return %arg0, %c0_i32 : i32, i32
  }
}

</mosaic_0001>

<llo_original>
// kernel: tpu_custom_call.1
$region0: #{tpu_custom_call.1}
  #allocation0 [shape = 'u32[]', space=smem, size = 0x4, offset = 0x4, fixed_abs, tag = 'smem constant byte address 0x4 - core index']
  #allocation1 [shape = 'u32[72,128]{1,0:T(1,128)}', space=vmem, size = 0x9000, scoped, tag = 'internal scratch']
  %s0 = inlined_call_operand.hbm [shape: bf16[8,768], index: 0, kind: input, shape index: {}]
  %s1 = inlined_call_operand.hbm [shape: bf16[768,384], index: 1, kind: input, shape index: {}]
  %s2 = inlined_call_operand.hbm [shape: bf16[384,768], index: 2, kind: input, shape index: {}]
  %s3 = inlined_call_operand.hbm [shape: f32[8,768], index: 3, kind: output, shape index: {}]
  %s4 = sld [smem:[#allocation0]]
  $region34: #{tpu_custom_call.1} parent=0
    _
  %s6 = ssub.s32 1, %s4
  %s7 = scalar_select 0, %s6, %s4
  $region1: #{tpu_custom_call.1} parent=0
    #allocation2 [shape = 'u8[12288]{0}', space=vmem, size = 0x3000, scoped, tag = 'input window, operand 0, single buffered']
    #allocation3 [shape = 's32[1]{0}', space=sflag, size = 0x4, scoped, tag = 'scoped memory for tpu_custom_call.1']
    #allocation4 [shape = 's32[1]{0}', space=sflag, size = 0x4, scoped, tag = 'scoped memory for tpu_custom_call.1']
    #allocation5 [shape = 'u8[589824]{0}', space=vmem, size = 0x90000, scoped, tag = 'input window, operand 1, single buffered']
    #allocation6 [shape = 's32[1]{0}', space=sflag, size = 0x4, scoped, tag = 'scoped memory for tpu_custom_call.1']
    #allocation7 [shape = 'u8[589824]{0}', space=vmem, size = 0x90000, scoped, tag = 'input window, operand 2, single buffered']
    #allocation8 [shape = 'u8[24576]{0}', space=vmem, size = 0x6000, scoped, tag = 'output window, operand 0, single buffered']
    %8 = vsyncpa [#allocation3], 0
    %9 = vsyncpa [#allocation6], 0
    %10 = vsyncpa [#allocation4], 0
    // Predicated region
    $region2: #{tpu_custom_call.1} parent=1 // pred_check
      _
    $region3: #{tpu_custom_call.1} parent=1 // pred_check_branch
      %12 = sbr.rel (0) target = $region5
    $region4: #{tpu_custom_call.1} parent=1 // pred_region
      %14 = vsyncadd [#allocation3], 0
      %s16 = sshll.u32 %s0, 4
      %s17 = int_to_ptr.hbm [resolvable:$true] %s16
      %s18 = sshll.u32 [#allocation2], 4
      %s19 = int_to_ptr.vmem [resolvable:$true] %s18
      %21 = dma.hbm_to_vmem [thread:$0]  %s17, 384, %s19, [#allocation3]
    $region5: #{tpu_custom_call.1} parent=1 // pred_fallthru
      _
    // Predicated region
    $region6: #{tpu_custom_call.1} parent=1 // pred_check
      _
    $region7: #{tpu_custom_call.1} parent=1 // pred_check_branch
      %23 = sbr.rel (0) target = $region9
    $region8: #{tpu_custom_call.1} parent=1 // pred_region
      %25 = vsyncadd [#allocation6], 0
      %s26 = sshll.u32 %s1, 4
      %s27 = int_to_ptr.hbm [resolvable:$true] %s26
      %s28 = sshll.u32 [#allocation5], 4
      %s29 = int_to_ptr.vmem [resolvable:$true] %s28
      %34 = dma.hbm_to_vmem [thread:$0]  %s27, 18432, %s29, [#allocation6], 192, 192, 12
    $region9: #{tpu_custom_call.1} parent=1 // pred_fallthru
      _
    // Predicated region
    $region10: #{tpu_custom_call.1} parent=1 // pred_check
      _
    $region11: #{tpu_custom_call.1} parent=1 // pred_check_branch
      %36 = sbr.rel (0) target = $region13
    $region12: #{tpu_custom_call.1} parent=1 // pred_region
      %38 = vsyncadd [#allocation6], 0
      %s39 = sshll.u32 %s2, 4
      %s40 = int_to_ptr.hbm [resolvable:$true] %s39
      %s41 = sshll.u32 [#allocation7], 4
      %s42 = int_to_ptr.vmem [resolvable:$true] %s41
      %47 = dma.hbm_to_vmem [thread:$0]  %s40, 18432, %s42, [#allocation6], 384, 384, 24
    $region13: #{tpu_custom_call.1} parent=1 // pred_fallthru
      _
    // Predicated region
    $region14: #{tpu_custom_call.1} parent=1 // pred_check
      _
    $region15: #{tpu_custom_call.1} parent=1 // pred_check_branch
      %49 = sbr.rel (0) target = $region17
    $region16: #{tpu_custom_call.1} parent=1 // pred_region
      %51 = dma.done [#allocation3], 384
    $region17: #{tpu_custom_call.1} parent=1 // pred_fallthru
      _
    // Predicated region
    $region18: #{tpu_custom_call.1} parent=1 // pred_check
      _
    $region19: #{tpu_custom_call.1} parent=1 // pred_check_branch
      %53 = sbr.rel (0) target = $region21
    $region20: #{tpu_custom_call.1} parent=1 // pred_region
      %55 = dma.done [#allocation6], 18432
    $region21: #{tpu_custom_call.1} parent=1 // pred_fallthru
      _
    // Predicated region
    $region22: #{tpu_custom_call.1} parent=1 // pred_check
      _
    $region23: #{tpu_custom_call.1} parent=1 // pred_check_branch
      %57 = sbr.rel (0) target = $region25
    $region24: #{tpu_custom_call.1} parent=1 // pred_region
      %59 = dma.done [#allocation6], 18432
    $region25: #{tpu_custom_call.1} parent=1 // pred_fallthru
      _
    %v60 = vld [vmem:[#allocation2] sm:$0xff]
    %v61 = vld [vmem:[#allocation2 + $0x8] sm:$0xff]
    %v62 = vld [vmem:[#allocation2 + $0x10] sm:$0xff]
    %v63 = vld [vmem:[#allocation5] sm:$0xff]
    %v64 = vld [vmem:[#allocation5 + $0x8] sm:$0xf]
    %v65 = vld [vmem:[#allocation5 + $0xc] sm:$0xff]
    %v66 = vld [vmem:[#allocation5 + $0x14] sm:$0xf]
    %v67 = vld [vmem:[#allocation5 + $0x18] sm:$0xff]
    %v68 = vld [vmem:[#allocation5 + $0x20] sm:$0xf]
    %v69 = vld [vmem:[#allocation5 + $0x24] sm:$0xff]
    %v70 = vld [vmem:[#allocation5 + $0x2c] sm:$0xf]
    %v71 = vld [vmem:[#allocation5 + $0x30] sm:$0xff]
    %v72 = vld [vmem:[#allocation5 + $0x38] sm:$0xf]
    %v73 = vld [vmem:[#allocation5 + $0x3c] sm:$0xff]
    %v74 = vld [vmem:[#allocation5 + $0x44] sm:$0xf]
    %v75 = vld [vmem:[#allocation5 + $0x48] sm:$0xff]
    %v76 = vld [vmem:[#allocation5 + $0x50] sm:$0xf]
    %v77 = vld [vmem:[#allocation5 + $0x54] sm:$0xff]
    %v78 = vld [vmem:[#allocation5 + $0x5c] sm:$0xf]
    %v79 = vld [vmem:[#allocation5 + $0x60] sm:$0xff]
    %v80 = vld [vmem:[#allocation5 + $0x68] sm:$0xf]
    %v81 = vld [vmem:[#allocation5 + $0x6c] sm:$0xff]
    %v82 = vld [vmem:[#allocation5 + $0x74] sm:$0xf]
    %v83 = vld [vmem:[#allocation5 + $0x78] sm:$0xff]
    %v84 = vld [vmem:[#allocation5 + $0x80] sm:$0xf]
    %v85 = vld [vmem:[#allocation5 + $0x84] sm:$0xff]
    %v86 = vld [vmem:[#allocation5 + $0x8c] sm:$0xf]
    %v87 = vld [vmem:[#allocation5 + $0x90] sm:$0xff]
    %v88 = vld [vmem:[#allocation5 + $0x98] sm:$0xf]
    %v89 = vld [vmem:[#allocation5 + $0x9c] sm:$0xff]
    %v90 = vld [vmem:[#allocation5 + $0xa4] sm:$0xf]
    %v91 = vld [vmem:[#allocation5 + $0xa8] sm:$0xff]
    %v92 = vld [vmem:[#allocation5 + $0xb0] sm:$0xf]
    %v93 = vld [vmem:[#allocation5 + $0xb4] sm:$0xff]
    %v94 = vld [vmem:[#allocation5 + $0xbc] sm:$0xf]
    %v95 = vld [vmem:[#allocation5 + $0xc0] sm:$0xff]
    %v96 = vld [vmem:[#allocation5 + $0xc8] sm:$0xf]
    %v97 = vld [vmem:[#allocation5 + $0xcc] sm:$0xff]
    %v98 = vld [vmem:[#allocation5 + $0xd4] sm:$0xf]
    %v99 = vld [vmem:[#allocation5 + $0xd8] sm:$0xff]
    %v100 = vld [vmem:[#allocation5 + $0xe0] sm:$0xf]
    %v101 = vld [vmem:[#allocation5 + $0xe4] sm:$0xff]
    %v102 = vld [vmem:[#allocation5 + $0xec] sm:$0xf]
    %v103 = vld [vmem:[#allocation5 + $0xf0] sm:$0xff]
    %v104 = vld [vmem:[#allocation5 + $0xf8] sm:$0xf]
    %v105 = vld [vmem:[#allocation5 + $0xfc] sm:$0xff]
    %v106 = vld [vmem:[#allocation5 + $0x104] sm:$0xf]
    %v107 = vld [vmem:[#allocation5 + $0x108] sm:$0xff]
    %v108 = vld [vmem:[#allocation5 + $0x110] sm:$0xf]
    %v109 = vld [vmem:[#allocation5 + $0x114] sm:$0xff]
    %v110 = vld [vmem:[#allocation5 + $0x11c] sm:$0xf]
    %v111 = vld [vmem:[#allocation5 + $0x120] sm:$0xff]
    %v112 = vld [vmem:[#allocation5 + $0x128] sm:$0xf]
    %v113 = vld [vmem:[#allocation5 + $0x12c] sm:$0xff]
    %v114 = vld [vmem:[#allocation5 + $0x134] sm:$0xf]
    %v115 = vld [vmem:[#allocation5 + $0x138] sm:$0xff]
    %v116 = vld [vmem:[#allocation5 + $0x140] sm:$0xf]
    %v117 = vld [vmem:[#allocation5 + $0x144] sm:$0xff]
    %v118 = vld [vmem:[#allocation5 + $0x14c] sm:$0xf]
    %v119 = vld [vmem:[#allocation5 + $0x150] sm:$0xff]
    %v120 = vld [vmem:[#allocation5 + $0x158] sm:$0xf]
    %v121 = vld [vmem:[#allocation5 + $0x15c] sm:$0xff]
    %v122 = vld [vmem:[#allocation5 + $0x164] sm:$0xf]
    %v123 = vld [vmem:[#allocation5 + $0x168] sm:$0xff]
    %v124 = vld [vmem:[#allocation5 + $0x170] sm:$0xf]
    %v125 = vld [vmem:[#allocation5 + $0x174] sm:$0xff]
    %v126 = vld [vmem:[#allocation5 + $0x17c] sm:$0xf]
    %v127 = vld [vmem:[#allocation5 + $0x180] sm:$0xff]
    %v128 = vld [vmem:[#allocation5 + $0x188] sm:$0xf]
    %v129 = vld [vmem:[#allocation5 + $0x18c] sm:$0xff]
    %v130 = vld [vmem:[#allocation5 + $0x194] sm:$0xf]
    %v131 = vld [vmem:[#allocation5 + $0x198] sm:$0xff]
    %v132 = vld [vmem:[#allocation5 + $0x1a0] sm:$0xf]
    %v133 = vld [vmem:[#allocation5 + $0x1a4] sm:$0xff]
    %v134 = vld [vmem:[#allocation5 + $0x1ac] sm:$0xf]
    %v135 = vld [vmem:[#allocation5 + $0x1b0] sm:$0xff]
    %v136 = vld [vmem:[#allocation5 + $0x1b8] sm:$0xf]
    %v137 = vld [vmem:[#allocation5 + $0x1bc] sm:$0xff]
    %v138 = vld [vmem:[#allocation5 + $0x1c4] sm:$0xf]
    %v139 = vld [vmem:[#allocation5 + $0x1c8] sm:$0xff]
    %v140 = vld [vmem:[#allocation5 + $0x1d0] sm:$0xf]
    %v141 = vld [vmem:[#allocation5 + $0x1d4] sm:$0xff]
    %v142 = vld [vmem:[#allocation5 + $0x1dc] sm:$0xf]
    %v143 = vld [vmem:[#allocation5 + $0x1e0] sm:$0xff]
    %v144 = vld [vmem:[#allocation5 + $0x1e8] sm:$0xf]
    %v145 = vld [vmem:[#allocation5 + $0x1ec] sm:$0xff]
    %v146 = vld [vmem:[#allocation5 + $0x1f4] sm:$0xf]
    %v147 = vld [vmem:[#allocation5 + $0x1f8] sm:$0xff]
    %v148 = vld [vmem:[#allocation5 + $0x200] sm:$0xf]
    %v149 = vld [vmem:[#allocation5 + $0x204] sm:$0xff]
    %v150 = vld [vmem:[#allocation5 + $0x20c] sm:$0xf]
    %v151 = vld [vmem:[#allocation5 + $0x210] sm:$0xff]
    %v152 = vld [vmem:[#allocation5 + $0x218] sm:$0xf]
    %v153 = vld [vmem:[#allocation5 + $0x21c] sm:$0xff]
    %v154 = vld [vmem:[#allocation5 + $0x224] sm:$0xf]
    %v155 = vld [vmem:[#allocation5 + $0x228] sm:$0xff]
    %v156 = vld [vmem:[#allocation5 + $0x230] sm:$0xf]
    %v157 = vld [vmem:[#allocation5 + $0x234] sm:$0xff]
    %v158 = vld [vmem:[#allocation5 + $0x23c] sm:$0xf]
    %v159 = vld [vmem:[#allocation5 + $0x240] sm:$0xff]
    %v160 = vld [vmem:[#allocation5 + $0x248] sm:$0xf]
    %v161 = vld [vmem:[#allocation5 + $0x24c] sm:$0xff]
    %v162 = vld [vmem:[#allocation5 + $0x254] sm:$0xf]
    %v163 = vld [vmem:[#allocation5 + $0x258] sm:$0xff]
    %v164 = vld [vmem:[#allocation5 + $0x260] sm:$0xf]
    %v165 = vld [vmem:[#allocation5 + $0x264] sm:$0xff]
    %v166 = vld [vmem:[#allocation5 + $0x26c] sm:$0xf]
    %v167 = vld [vmem:[#allocation5 + $0x270] sm:$0xff]
    %v168 = vld [vmem:[#allocation5 + $0x278] sm:$0xf]
    %v169 = vld [vmem:[#allocation5 + $0x27c] sm:$0xff]
    %v170 = vld [vmem:[#allocation5 + $0x284] sm:$0xf]
    %v171 = vld [vmem:[#allocation5 + $0x288] sm:$0xff]
    %v172 = vld [vmem:[#allocation5 + $0x290] sm:$0xf]
    %v173 = vld [vmem:[#allocation5 + $0x294] sm:$0xff]
    %v174 = vld [vmem:[#allocation5 + $0x29c] sm:$0xf]
    %v175 = vld [vmem:[#allocation5 + $0x2a0] sm:$0xff]
    %v176 = vld [vmem:[#allocation5 + $0x2a8] sm:$0xf]
    %v177 = vld [vmem:[#allocation5 + $0x2ac] sm:$0xff]
    %v178 = vld [vmem:[#allocation5 + $0x2b4] sm:$0xf]
    %v179 = vld [vmem:[#allocation5 + $0x2b8] sm:$0xff]
    %v180 = vld [vmem:[#allocation5 + $0x2c0] sm:$0xf]
    %v181 = vld [vmem:[#allocation5 + $0x2c4] sm:$0xff]
    %v182 = vld [vmem:[#allocation5 + $0x2cc] sm:$0xf]
    %v183 = vld [vmem:[#allocation5 + $0x2d0] sm:$0xff]
    %v184 = vld [vmem:[#allocation5 + $0x2d8] sm:$0xf]
    %v185 = vld [vmem:[#allocation5 + $0x2dc] sm:$0xff]
    %v186 = vld [vmem:[#allocation5 + $0x2e4] sm:$0xf]
    %v187 = vld [vmem:[#allocation5 + $0x2e8] sm:$0xff]
    %v188 = vld [vmem:[#allocation5 + $0x2f0] sm:$0xf]
    %v189 = vld [vmem:[#allocation5 + $0x2f4] sm:$0xff]
    %v190 = vld [vmem:[#allocation5 + $0x2fc] sm:$0xf]
    %v191 = vld [vmem:[#allocation5 + $0x300] sm:$0xff]
    %v192 = vld [vmem:[#allocation5 + $0x308] sm:$0xf]
    %v193 = vld [vmem:[#allocation5 + $0x30c] sm:$0xff]
    %v194 = vld [vmem:[#allocation5 + $0x314] sm:$0xf]
    %v195 = vld [vmem:[#allocation5 + $0x318] sm:$0xff]
    %v196 = vld [vmem:[#allocation5 + $0x320] sm:$0xf]
    %v197 = vld [vmem:[#allocation5 + $0x324] sm:$0xff]
    %v198 = vld [vmem:[#allocation5 + $0x32c] sm:$0xf]
    %v199 = vld [vmem:[#allocation5 + $0x330] sm:$0xff]
    %v200 = vld [vmem:[#allocation5 + $0x338] sm:$0xf]
    %v201 = vld [vmem:[#allocation5 + $0x33c] sm:$0xff]
    %v202 = vld [vmem:[#allocation5 + $0x344] sm:$0xf]
    %v203 = vld [vmem:[#allocation5 + $0x348] sm:$0xff]
    %v204 = vld [vmem:[#allocation5 + $0x350] sm:$0xf]
    %v205 = vld [vmem:[#allocation5 + $0x354] sm:$0xff]
    %v206 = vld [vmem:[#allocation5 + $0x35c] sm:$0xf]
    %v207 = vld [vmem:[#allocation5 + $0x360] sm:$0xff]
    %v208 = vld [vmem:[#allocation5 + $0x368] sm:$0xf]
    %v209 = vld [vmem:[#allocation5 + $0x36c] sm:$0xff]
    %v210 = vld [vmem:[#allocation5 + $0x374] sm:$0xf]
    %v211 = vld [vmem:[#allocation5 + $0x378] sm:$0xff]
    %v212 = vld [vmem:[#allocation5 + $0x380] sm:$0xf]
    %v213 = vld [vmem:[#allocation5 + $0x384] sm:$0xff]
    %v214 = vld [vmem:[#allocation5 + $0x38c] sm:$0xf]
    %v215 = vld [vmem:[#allocation5 + $0x390] sm:$0xff]
    %v216 = vld [vmem:[#allocation5 + $0x398] sm:$0xf]
    %v217 = vld [vmem:[#allocation5 + $0x39c] sm:$0xff]
    %v218 = vld [vmem:[#allocation5 + $0x3a4] sm:$0xf]
    %v219 = vld [vmem:[#allocation5 + $0x3a8] sm:$0xff]
    %v220 = vld [vmem:[#allocation5 + $0x3b0] sm:$0xf]
    %v221 = vld [vmem:[#allocation5 + $0x3b4] sm:$0xff]
    %v222 = vld [vmem:[#allocation5 + $0x3bc] sm:$0xf]
    %v223 = vld [vmem:[#allocation5 + $0x3c0] sm:$0xff]
    %v224 = vld [vmem:[#allocation5 + $0x3c8] sm:$0xf]
    %v225 = vld [vmem:[#allocation5 + $0x3cc] sm:$0xff]
    %v226 = vld [vmem:[#allocation5 + $0x3d4] sm:$0xf]
    %v227 = vld [vmem:[#allocation5 + $0x3d8] sm:$0xff]
    %v228 = vld [vmem:[#allocation5 + $0x3e0] sm:$0xf]
    %v229 = vld [vmem:[#allocation5 + $0x3e4] sm:$0xff]
    %v230 = vld [vmem:[#allocation5 + $0x3ec] sm:$0xf]
    %v231 = vld [vmem:[#allocation5 + $0x3f0] sm:$0xff]
    %v232 = vld [vmem:[#allocation5 + $0x3f8] sm:$0xf]
    %v233 = vld [vmem:[#allocation5 + $0x3fc] sm:$0xff]
    %v234 = vld [vmem:[#allocation5 + $0x404] sm:$0xf]
    %v235 = vld [vmem:[#allocation5 + $0x408] sm:$0xff]
    %v236 = vld [vmem:[#allocation5 + $0x410] sm:$0xf]
    %v237 = vld [vmem:[#allocation5 + $0x414] sm:$0xff]
    %v238 = vld [vmem:[#allocation5 + $0x41c] sm:$0xf]
    %v239 = vld [vmem:[#allocation5 + $0x420] sm:$0xff]
    %v240 = vld [vmem:[#allocation5 + $0x428] sm:$0xf]
    %v241 = vld [vmem:[#allocation5 + $0x42c] sm:$0xff]
    %v242 = vld [vmem:[#allocation5 + $0x434] sm:$0xf]
    %v243 = vld [vmem:[#allocation5 + $0x438] sm:$0xff]
    %v244 = vld [vmem:[#allocation5 + $0x440] sm:$0xf]
    %v245 = vld [vmem:[#allocation5 + $0x444] sm:$0xff]
    %v246 = vld [vmem:[#allocation5 + $0x44c] sm:$0xf]
    %v247 = vld [vmem:[#allocation5 + $0x450] sm:$0xff]
    %v248 = vld [vmem:[#allocation5 + $0x458] sm:$0xf]
    %v249 = vld [vmem:[#allocation5 + $0x45c] sm:$0xff]
    %v250 = vld [vmem:[#allocation5 + $0x464] sm:$0xf]
    %v251 = vld [vmem:[#allocation5 + $0x468] sm:$0xff]
    %v252 = vld [vmem:[#allocation5 + $0x470] sm:$0xf]
    %v253 = vld [vmem:[#allocation5 + $0x474] sm:$0xff]
    %v254 = vld [vmem:[#allocation5 + $0x47c] sm:$0xf]
    %v258 = vunpack.c.l.b16 %v60
    %v259 = vunpack.c.h.b16 %v60
    %v260 = vunpack.c.l.b16 %v61
    %v261 = vunpack.c.h.b16 %v61
    %v262 = vunpack.c.l.b16 %v62
    %v263 = vunpack.c.h.b16 %v62
    %v264 = vpack.c.b16 %v258, %v258
    %v265 = vpack.c.b16 %v259, %v259
    %v266 = vpack.c.b16 %v260, %v260
    %v267 = vpack.c.b16 %v261, %v261
    %v268 = vpack.c.b16 %v262, %v262
    %v269 = vpack.c.b16 %v263, %v263
    %v468 = vunpack.c.l.b16 %v63
    %v469 = vunpack.c.h.b16 %v63
    %v470 = vunpack.c.l.b16 %v64
    %v471 = vunpack.c.l.b16 %v65
    %v472 = vunpack.c.h.b16 %v65
    %v473 = vunpack.c.l.b16 %v66
    %v474 = vunpack.c.l.b16 %v67
    %v475 = vunpack.c.h.b16 %v67
    %v476 = vunpack.c.l.b16 %v68
    %v477 = vunpack.c.l.b16 %v69
    %v478 = vunpack.c.h.b16 %v69
    %v479 = vunpack.c.l.b16 %v70
    %v480 = vunpack.c.l.b16 %v71
    %v481 = vunpack.c.h.b16 %v71
    %v482 = vunpack.c.l.b16 %v72
    %v483 = vunpack.c.l.b16 %v73
    %v484 = vunpack.c.h.b16 %v73
    %v485 = vunpack.c.l.b16 %v74
    %v486 = vunpack.c.l.b16 %v75
    %v487 = vunpack.c.h.b16 %v75
    %v488 = vunpack.c.l.b16 %v76
    %v489 = vunpack.c.l.b16 %v77
    %v490 = vunpack.c.h.b16 %v77
    %v491 = vunpack.c.l.b16 %v78
    %v492 = vunpack.c.l.b16 %v79
    %v493 = vunpack.c.h.b16 %v79
    %v494 = vunpack.c.l.b16 %v80
    %v495 = vunpack.c.l.b16 %v81
    %v496 = vunpack.c.h.b16 %v81
    %v497 = vunpack.c.l.b16 %v82
    %v498 = vunpack.c.l.b16 %v83
    %v499 = vunpack.c.h.b16 %v83
    %v500 = vunpack.c.l.b16 %v84
    %v501 = vunpack.c.l.b16 %v85
    %v502 = vunpack.c.h.b16 %v85
    %v503 = vunpack.c.l.b16 %v86
    %v504 = vunpack.c.l.b16 %v87
    %v505 = vunpack.c.h.b16 %v87
    %v506 = vunpack.c.l.b16 %v88
    %v507 = vunpack.c.l.b16 %v89
    %v508 = vunpack.c.h.b16 %v89
    %v509 = vunpack.c.l.b16 %v90
    %v510 = vunpack.c.l.b16 %v91
    %v511 = vunpack.c.h.b16 %v91
    %v512 = vunpack.c.l.b16 %v92
    %v513 = vunpack.c.l.b16 %v93
    %v514 = vunpack.c.h.b16 %v93
    %v515 = vunpack.c.l.b16 %v94
    %v516 = vunpack.c.l.b16 %v95
    %v517 = vunpack.c.h.b16 %v95
    %v518 = vunpack.c.l.b16 %v96
    %v519 = vunpack.c.l.b16 %v97
    %v520 = vunpack.c.h.b16 %v97
    %v521 = vunpack.c.l.b16 %v98
    %v522 = vunpack.c.l.b16 %v99
    %v523 = vunpack.c.h.b16 %v99
    %v524 = vunpack.c.l.b16 %v100
    %v525 = vunpack.c.l.b16 %v101
    %v526 = vunpack.c.h.b16 %v101
    %v527 = vunpack.c.l.b16 %v102
    %v528 = vunpack.c.l.b16 %v103
    %v529 = vunpack.c.h.b16 %v103
    %v530 = vunpack.c.l.b16 %v104
    %v531 = vunpack.c.l.b16 %v105
    %v532 = vunpack.c.h.b16 %v105
    %v533 = vunpack.c.l.b16 %v106
    %v534 = vunpack.c.l.b16 %v107
    %v535 = vunpack.c.h.b16 %v107
    %v536 = vunpack.c.l.b16 %v108
    %v537 = vunpack.c.l.b16 %v109
    %v538 = vunpack.c.h.b16 %v109
    %v539 = vunpack.c.l.b16 %v110
    %v540 = vunpack.c.l.b16 %v111
    %v541 = vunpack.c.h.b16 %v111
    %v542 = vunpack.c.l.b16 %v112
    %v543 = vunpack.c.l.b16 %v113
    %v544 = vunpack.c.h.b16 %v113
    %v545 = vunpack.c.l.b16 %v114
    %v546 = vunpack.c.l.b16 %v115
    %v547 = vunpack.c.h.b16 %v115
    %v548 = vunpack.c.l.b16 %v116
    %v549 = vunpack.c.l.b16 %v117
    %v550 = vunpack.c.h.b16 %v117
    %v551 = vunpack.c.l.b16 %v118
    %v552 = vunpack.c.l.b16 %v119
    %v553 = vunpack.c.h.b16 %v119
    %v554 = vunpack.c.l.b16 %v120
    %v555 = vunpack.c.l.b16 %v121
    %v556 = vunpack.c.h.b16 %v121
    %v557 = vunpack.c.l.b16 %v122
    %v558 = vunpack.c.l.b16 %v123
    %v559 = vunpack.c.h.b16 %v123
    %v560 = vunpack.c.l.b16 %v124
    %v561 = vunpack.c.l.b16 %v125
    %v562 = vunpack.c.h.b16 %v125
    %v563 = vunpack.c.l.b16 %v126
    %v564 = vunpack.c.l.b16 %v127
    %v565 = vunpack.c.h.b16 %v127
    %v566 = vunpack.c.l.b16 %v128
    %v567 = vunpack.c.l.b16 %v129
    %v568 = vunpack.c.h.b16 %v129
    %v569 = vunpack.c.l.b16 %v130
    %v570 = vunpack.c.l.b16 %v131
    %v571 = vunpack.c.h.b16 %v131
    %v572 = vunpack.c.l.b16 %v132
    %v573 = vunpack.c.l.b16 %v133
    %v574 = vunpack.c.h.b16 %v133
    %v575 = vunpack.c.l.b16 %v134
    %v576 = vunpack.c.l.b16 %v135
    %v577 = vunpack.c.h.b16 %v135
    %v578 = vunpack.c.l.b16 %v136
    %v579 = vunpack.c.l.b16 %v137
    %v580 = vunpack.c.h.b16 %v137
    %v581 = vunpack.c.l.b16 %v138
    %v582 = vunpack.c.l.b16 %v139
    %v583 = vunpack.c.h.b16 %v139
    %v584 = vunpack.c.l.b16 %v140
    %v585 = vunpack.c.l.b16 %v141
    %v586 = vunpack.c.h.b16 %v141
    %v587 = vunpack.c.l.b16 %v142
    %v588 = vunpack.c.l.b16 %v143
    %v589 = vunpack.c.h.b16 %v143
    %v590 = vunpack.c.l.b16 %v144
    %v591 = vunpack.c.l.b16 %v145
    %v592 = vunpack.c.h.b16 %v145
    %v593 = vunpack.c.l.b16 %v146
    %v594 = vunpack.c.l.b16 %v147
    %v595 = vunpack.c.h.b16 %v147
    %v596 = vunpack.c.l.b16 %v148
    %v597 = vunpack.c.l.b16 %v149
    %v598 = vunpack.c.h.b16 %v149
    %v599 = vunpack.c.l.b16 %v150
    %v600 = vunpack.c.l.b16 %v151
    %v601 = vunpack.c.h.b16 %v151
    %v602 = vunpack.c.l.b16 %v152
    %v603 = vunpack.c.l.b16 %v153
    %v604 = vunpack.c.h.b16 %v153
    %v605 = vunpack.c.l.b16 %v154
    %v606 = vunpack.c.l.b16 %v155
    %v607 = vunpack.c.h.b16 %v155
    %v608 = vunpack.c.l.b16 %v156
    %v609 = vunpack.c.l.b16 %v157
    %v610 = vunpack.c.h.b16 %v157
    %v611 = vunpack.c.l.b16 %v158
    %v612 = vunpack.c.l.b16 %v159
    %v613 = vunpack.c.h.b16 %v159
    %v614 = vunpack.c.l.b16 %v160
    %v615 = vunpack.c.l.b16 %v161
    %v616 = vunpack.c.h.b16 %v161
    %v617 = vunpack.c.l.b16 %v162
    %v618 = vunpack.c.l.b16 %v163
    %v619 = vunpack.c.h.b16 %v163
    %v620 = vunpack.c.l.b16 %v164
    %v621 = vunpack.c.l.b16 %v165
    %v622 = vunpack.c.h.b16 %v165
    %v623 = vunpack.c.l.b16 %v166
    %v624 = vunpack.c.l.b16 %v167
    %v625 = vunpack.c.h.b16 %v167
    %v626 = vunpack.c.l.b16 %v168
    %v627 = vunpack.c.l.b16 %v169
    %v628 = vunpack.c.h.b16 %v169
    %v629 = vunpack.c.l.b16 %v170
    %v630 = vunpack.c.l.b16 %v171
    %v631 = vunpack.c.h.b16 %v171
    %v632 = vunpack.c.l.b16 %v172
    %v633 = vunpack.c.l.b16 %v173
    %v634 = vunpack.c.h.b16 %v173
    %v635 = vunpack.c.l.b16 %v174
    %v636 = vunpack.c.l.b16 %v175
    %v637 = vunpack.c.h.b16 %v175
    %v638 = vunpack.c.l.b16 %v176
    %v639 = vunpack.c.l.b16 %v177
    %v640 = vunpack.c.h.b16 %v177
    %v641 = vunpack.c.l.b16 %v178
    %v642 = vunpack.c.l.b16 %v179
    %v643 = vunpack.c.h.b16 %v179
    %v644 = vunpack.c.l.b16 %v180
    %v645 = vunpack.c.l.b16 %v181
    %v646 = vunpack.c.h.b16 %v181
    %v647 = vunpack.c.l.b16 %v182
    %v648 = vunpack.c.l.b16 %v183
    %v649 = vunpack.c.h.b16 %v183
    %v650 = vunpack.c.l.b16 %v184
    %v651 = vunpack.c.l.b16 %v185
    %v652 = vunpack.c.h.b16 %v185
    %v653 = vunpack.c.l.b16 %v186
    %v654 = vunpack.c.l.b16 %v187
    %v655 = vunpack.c.h.b16 %v187
    %v656 = vunpack.c.l.b16 %v188
    %v657 = vunpack.c.l.b16 %v189
    %v658 = vunpack.c.h.b16 %v189
    %v659 = vunpack.c.l.b16 %v190
    %v660 = vunpack.c.l.b16 %v191
    %v661 = vunpack.c.h.b16 %v191
    %v662 = vunpack.c.l.b16 %v192
    %v663 = vunpack.c.l.b16 %v193
    %v664 = vunpack.c.h.b16 %v193
    %v665 = vunpack.c.l.b16 %v194
    %v666 = vunpack.c.l.b16 %v195
    %v667 = vunpack.c.h.b16 %v195
    %v668 = vunpack.c.l.b16 %v196
    %v669 = vunpack.c.l.b16 %v197
    %v670 = vunpack.c.h.b16 %v197
    %v671 = vunpack.c.l.b16 %v198
    %v672 = vunpack.c.l.b16 %v199
    %v673 = vunpack.c.h.b16 %v199
    %v674 = vunpack.c.l.b16 %v200
    %v675 = vunpack.c.l.b16 %v201
    %v676 = vunpack.c.h.b16 %v201
    %v677 = vunpack.c.l.b16 %v202
    %v678 = vunpack.c.l.b16 %v203
    %v679 = vunpack.c.h.b16 %v203
    %v680 = vunpack.c.l.b16 %v204
    %v681 = vunpack.c.l.b16 %v205
    %v682 = vunpack.c.h.b16 %v205
    %v683 = vunpack.c.l.b16 %v206
    %v684 = vunpack.c.l.b16 %v207
    %v685 = vunpack.c.h.b16 %v207
    %v686 = vunpack.c.l.b16 %v208
    %v687 = vunpack.c.l.b16 %v209
    %v688 = vunpack.c.h.b16 %v209
    %v689 = vunpack.c.l.b16 %v210
    %v690 = vunpack.c.l.b16 %v211
    %v691 = vunpack.c.h.b16 %v211
    %v692 = vunpack.c.l.b16 %v212
    %v693 = vunpack.c.l.b16 %v213
    %v694 = vunpack.c.h.b16 %v213
    %v695 = vunpack.c.l.b16 %v214
    %v696 = vunpack.c.l.b16 %v215
    %v697 = vunpack.c.h.b16 %v215
    %v698 = vunpack.c.l.b16 %v216
    %v699 = vunpack.c.l.b16 %v217
    %v700 = vunpack.c.h.b16 %v217
    %v701 = vunpack.c.l.b16 %v218
    %v702 = vunpack.c.l.b16 %v219
    %v703 = vunpack.c.h.b16 %v219
    %v704 = vunpack.c.l.b16 %v220
    %v705 = vunpack.c.l.b16 %v221
    %v706 = vunpack.c.h.b16 %v221
    %v707 = vunpack.c.l.b16 %v222
    %v708 = vunpack.c.l.b16 %v223
    %v709 = vunpack.c.h.b16 %v223
    %v710 = vunpack.c.l.b16 %v224
    %v711 = vunpack.c.l.b16 %v225
    %v712 = vunpack.c.h.b16 %v225
    %v713 = vunpack.c.l.b16 %v226
    %v714 = vunpack.c.l.b16 %v227
    %v715 = vunpack.c.h.b16 %v227
    %v716 = vunpack.c.l.b16 %v228
    %v717 = vunpack.c.l.b16 %v229
    %v718 = vunpack.c.h.b16 %v229
    %v719 = vunpack.c.l.b16 %v230
    %v720 = vunpack.c.l.b16 %v231
    %v721 = vunpack.c.h.b16 %v231
    %v722 = vunpack.c.l.b16 %v232
    %v723 = vunpack.c.l.b16 %v233
    %v724 = vunpack.c.h.b16 %v233
    %v725 = vunpack.c.l.b16 %v234
    %v726 = vunpack.c.l.b16 %v235
    %v727 = vunpack.c.h.b16 %v235
    %v728 = vunpack.c.l.b16 %v236
    %v729 = vunpack.c.l.b16 %v237
    %v730 = vunpack.c.h.b16 %v237
    %v731 = vunpack.c.l.b16 %v238
    %v732 = vunpack.c.l.b16 %v239
    %v733 = vunpack.c.h.b16 %v239
    %v734 = vunpack.c.l.b16 %v240
    %v735 = vunpack.c.l.b16 %v241
    %v736 = vunpack.c.h.b16 %v241
    %v737 = vunpack.c.l.b16 %v242
    %v738 = vunpack.c.l.b16 %v243
    %v739 = vunpack.c.h.b16 %v243
    %v740 = vunpack.c.l.b16 %v244
    %v741 = vunpack.c.l.b16 %v245
    %v742 = vunpack.c.h.b16 %v245
    %v743 = vunpack.c.l.b16 %v246
    %v744 = vunpack.c.l.b16 %v247
    %v745 = vunpack.c.h.b16 %v247
    %v746 = vunpack.c.l.b16 %v248
    %v747 = vunpack.c.l.b16 %v249
    %v748 = vunpack.c.h.b16 %v249
    %v749 = vunpack.c.l.b16 %v250
    %v750 = vunpack.c.l.b16 %v251
    %v751 = vunpack.c.h.b16 %v251
    %v752 = vunpack.c.l.b16 %v252
    %v753 = vunpack.c.l.b16 %v253
    %v754 = vunpack.c.h.b16 %v253
    %v755 = vunpack.c.l.b16 %v254
    %v756 = vpack.c.b16 %v471, %v468
    %v757 = vpack.c.b16 %v472, %v469
    %v758 = vpack.c.b16 %v473, %v470
    %v759 = vpack.c.b16 %v477, %v474
    %v760 = vpack.c.b16 %v478, %v475
    %v761 = vpack.c.b16 %v479, %v476
    %v762 = vpack.c.b16 %v483, %v480
    %v763 = vpack.c.b16 %v484, %v481
    %v764 = vpack.c.b16 %v485, %v482
    %v765 = vpack.c.b16 %v489, %v486
    %v766 = vpack.c.b16 %v490, %v487
    %v767 = vpack.c.b16 %v491, %v488
    %v768 = vpack.c.b16 %v495, %v492
    %v769 = vpack.c.b16 %v496, %v493
    %v770 = vpack.c.b16 %v497, %v494
    %v771 = vpack.c.b16 %v501, %v498
    %v772 = vpack.c.b16 %v502, %v499
    %v773 = vpack.c.b16 %v503, %v500
    %v774 = vpack.c.b16 %v507, %v504
    %v775 = vpack.c.b16 %v508, %v505
    %v776 = vpack.c.b16 %v509, %v506
    %v777 = vpack.c.b16 %v513, %v510
    %v778 = vpack.c.b16 %v514, %v511
    %v779 = vpack.c.b16 %v515, %v512
    %v780 = vpack.c.b16 %v519, %v516
    %v781 = vpack.c.b16 %v520, %v517
    %v782 = vpack.c.b16 %v521, %v518
    %v783 = vpack.c.b16 %v525, %v522
    %v784 = vpack.c.b16 %v526, %v523
    %v785 = vpack.c.b16 %v527, %v524
    %v786 = vpack.c.b16 %v531, %v528
    %v787 = vpack.c.b16 %v532, %v529
    %v788 = vpack.c.b16 %v533, %v530
    %v789 = vpack.c.b16 %v537, %v534
    %v790 = vpack.c.b16 %v538, %v535
    %v791 = vpack.c.b16 %v539, %v536
    %v792 = vpack.c.b16 %v543, %v540
    %v793 = vpack.c.b16 %v544, %v541
    %v794 = vpack.c.b16 %v545, %v542
    %v795 = vpack.c.b16 %v549, %v546
    %v796 = vpack.c.b16 %v550, %v547
    %v797 = vpack.c.b16 %v551, %v548
    %v798 = vpack.c.b16 %v555, %v552
    %v799 = vpack.c.b16 %v556, %v553
    %v800 = vpack.c.b16 %v557, %v554
    %v801 = vpack.c.b16 %v561, %v558
    %v802 = vpack.c.b16 %v562, %v559
    %v803 = vpack.c.b16 %v563, %v560
    %v804 = vpack.c.b16 %v567, %v564
    %v805 = vpack.c.b16 %v568, %v565
    %v806 = vpack.c.b16 %v569, %v566
    %v807 = vpack.c.b16 %v573, %v570
    %v808 = vpack.c.b16 %v574, %v571
    %v809 = vpack.c.b16 %v575, %v572
    %v810 = vpack.c.b16 %v579, %v576
    %v811 = vpack.c.b16 %v580, %v577
    %v812 = vpack.c.b16 %v581, %v578
    %v813 = vpack.c.b16 %v585, %v582
    %v814 = vpack.c.b16 %v586, %v583
    %v815 = vpack.c.b16 %v587, %v584
    %v816 = vpack.c.b16 %v591, %v588
    %v817 = vpack.c.b16 %v592, %v589
    %v818 = vpack.c.b16 %v593, %v590
    %v819 = vpack.c.b16 %v597, %v594
    %v820 = vpack.c.b16 %v598, %v595
    %v821 = vpack.c.b16 %v599, %v596
    %v822 = vpack.c.b16 %v603, %v600
    %v823 = vpack.c.b16 %v604, %v601
    %v824 = vpack.c.b16 %v605, %v602
    %v825 = vpack.c.b16 %v609, %v606
    %v826 = vpack.c.b16 %v610, %v607
    %v827 = vpack.c.b16 %v611, %v608
    %v828 = vpack.c.b16 %v615, %v612
    %v829 = vpack.c.b16 %v616, %v613
    %v830 = vpack.c.b16 %v617, %v614
    %v831 = vpack.c.b16 %v621, %v618
    %v832 = vpack.c.b16 %v622, %v619
    %v833 = vpack.c.b16 %v623, %v620
    %v834 = vpack.c.b16 %v627, %v624
    %v835 = vpack.c.b16 %v628, %v625
    %v836 = vpack.c.b16 %v629, %v626
    %v837 = vpack.c.b16 %v633, %v630
    %v838 = vpack.c.b16 %v634, %v631
    %v839 = vpack.c.b16 %v635, %v632
    %v840 = vpack.c.b16 %v639, %v636
    %v841 = vpack.c.b16 %v640, %v637
    %v842 = vpack.c.b16 %v641, %v638
    %v843 = vpack.c.b16 %v645, %v642
    %v844 = vpack.c.b16 %v646, %v643
    %v845 = vpack.c.b16 %v647, %v644
    %v846 = vpack.c.b16 %v651, %v648
    %v847 = vpack.c.b16 %v652, %v649
    %v848 = vpack.c.b16 %v653, %v650
    %v849 = vpack.c.b16 %v657, %v654
    %v850 = vpack.c.b16 %v658, %v655
    %v851 = vpack.c.b16 %v659, %v656
    %v852 = vpack.c.b16 %v663, %v660
    %v853 = vpack.c.b16 %v664, %v661
    %v854 = vpack.c.b16 %v665, %v662
    %v855 = vpack.c.b16 %v669, %v666
    %v856 = vpack.c.b16 %v670, %v667
    %v857 = vpack.c.b16 %v671, %v668
    %v858 = vpack.c.b16 %v675, %v672
    %v859 = vpack.c.b16 %v676, %v673
    %v860 = vpack.c.b16 %v677, %v674
    %v861 = vpack.c.b16 %v681, %v678
    %v862 = vpack.c.b16 %v682, %v679
    %v863 = vpack.c.b16 %v683, %v680
    %v864 = vpack.c.b16 %v687, %v684
    %v865 = vpack.c.b16 %v688, %v685
    %v866 = vpack.c.b16 %v689, %v686
    %v867 = vpack.c.b16 %v693, %v690
    %v868 = vpack.c.b16 %v694, %v691
    %v869 = vpack.c.b16 %v695, %v692
    %v870 = vpack.c.b16 %v699, %v696
    %v871 = vpack.c.b16 %v700, %v697
    %v872 = vpack.c.b16 %v701, %v698
    %v873 = vpack.c.b16 %v705, %v702
    %v874 = vpack.c.b16 %v706, %v703
    %v875 = vpack.c.b16 %v707, %v704
    %v876 = vpack.c.b16 %v711, %v708
    %v877 = vpack.c.b16 %v712, %v709
    %v878 = vpack.c.b16 %v713, %v710
    %v879 = vpack.c.b16 %v717, %v714
    %v880 = vpack.c.b16 %v718, %v715
    %v881 = vpack.c.b16 %v719, %v716
    %v882 = vpack.c.b16 %v723, %v720
    %v883 = vpack.c.b16 %v724, %v721
    %v884 = vpack.c.b16 %v725, %v722
    %v885 = vpack.c.b16 %v729, %v726
    %v886 = vpack.c.b16 %v730, %v727
    %v887 = vpack.c.b16 %v731, %v728
    %v888 = vpack.c.b16 %v735, %v732
    %v889 = vpack.c.b16 %v736, %v733
    %v890 = vpack.c.b16 %v737, %v734
    %v891 = vpack.c.b16 %v741, %v738
    %v892 = vpack.c.b16 %v742, %v739
    %v893 = vpack.c.b16 %v743, %v740
    %v894 = vpack.c.b16 %v747, %v744
    %v895 = vpack.c.b16 %v748, %v745
    %v896 = vpack.c.b16 %v749, %v746
    %v897 = vpack.c.b16 %v753, %v750
    %v898 = vpack.c.b16 %v754, %v751
    %v899 = vpack.c.b16 %v755, %v752
    %1044 = vmatpush.bf16.msra.mxu0 %v777
    %1045 = vmatpush.bf16.msra.mxu0 %v774
    %1046 = vmatpush.bf16.msra.mxu0 %v771
    %1047 = vmatpush.bf16.msra.mxu0 %v768
    %1048 = vmatpush.bf16.msra.mxu0 %v765
    %1049 = vmatpush.bf16.msra.mxu0 %v762
    %1050 = vmatpush.bf16.msra.mxu0 %v759
    %1051 = vmatpush.bf16.msra.mxu0 %v756
    %1052 = vmatmul.bf16.gmra.mxu0 %v264
    %v1053 = vpop.f32.mrf.mxu0
    %v1054 = vadd.f32 0.0, %v1053
    %v1055 = vpop.f32.mrf.mxu0
    %1056 = vdwg.mxu0
    %1057 = vmatpush.bf16.msra.mxu0 %v801
    %1058 = vmatpush.bf16.msra.mxu0 %v798
    %1059 = vmatpush.bf16.msra.mxu0 %v795
    %1060 = vmatpush.bf16.msra.mxu0 %v792
    %1061 = vmatpush.bf16.msra.mxu0 %v789
    %1062 = vmatpush.bf16.msra.mxu0 %v786
    %1063 = vmatpush.bf16.msra.mxu0 %v783
    %1064 = vmatpush.bf16.msra.mxu0 %v780
    %1065 = vmatmul.bf16.gmra.mxu0 %v265
    %v1066 = vpop.f32.mrf.mxu0
    %v1067 = vadd.f32 %v1054, %v1066
    %v1068 = vpop.f32.mrf.mxu0
    %1069 = vdwg.mxu0
    %1070 = vmatpush.bf16.msra.mxu0 %v825
    %1071 = vmatpush.bf16.msra.mxu0 %v822
    %1072 = vmatpush.bf16.msra.mxu0 %v819
    %1073 = vmatpush.bf16.msra.mxu0 %v816
    %1074 = vmatpush.bf16.msra.mxu0 %v813
    %1075 = vmatpush.bf16.msra.mxu0 %v810
    %1076 = vmatpush.bf16.msra.mxu0 %v807
    %1077 = vmatpush.bf16.msra.mxu0 %v804
    %1078 = vmatmul.bf16.gmra.mxu0 %v266
    %v1079 = vpop.f32.mrf.mxu0
    %v1080 = vadd.f32 %v1067, %v1079
    %v1081 = vpop.f32.mrf.mxu0
    %1082 = vdwg.mxu0
    %1083 = vmatpush.bf16.msra.mxu0 %v849
    %1084 = vmatpush.bf16.msra.mxu0 %v846
    %1085 = vmatpush.bf16.msra.mxu0 %v843
    %1086 = vmatpush.bf16.msra.mxu0 %v840
    %1087 = vmatpush.bf16.msra.mxu0 %v837
    %1088 = vmatpush.bf16.msra.mxu0 %v834
    %1089 = vmatpush.bf16.msra.mxu0 %v831
    %1090 = vmatpush.bf16.msra.mxu0 %v828
    %1091 = vmatmul.bf16.gmra.mxu0 %v267
    %v1092 = vpop.f32.mrf.mxu0
    %v1093 = vadd.f32 %v1080, %v1092
    %v1094 = vpop.f32.mrf.mxu0
    %1095 = vdwg.mxu0
    %1096 = vmatpush.bf16.msra.mxu0 %v873
    %1097 = vmatpush.bf16.msra.mxu0 %v870
    %1098 = vmatpush.bf16.msra.mxu0 %v867
    %1099 = vmatpush.bf16.msra.mxu0 %v864
    %1100 = vmatpush.bf16.msra.mxu0 %v861
    %1101 = vmatpush.bf16.msra.mxu0 %v858
    %1102 = vmatpush.bf16.msra.mxu0 %v855
    %1103 = vmatpush.bf16.msra.mxu0 %v852
    %1104 = vmatmul.bf16.gmra.mxu0 %v268
    %v1105 = vpop.f32.mrf.mxu0
    %v1106 = vadd.f32 %v1093, %v1105
    %v1107 = vpop.f32.mrf.mxu0
    %1108 = vdwg.mxu0
    %1109 = vmatpush.bf16.msra.mxu0 %v897
    %1110 = vmatpush.bf16.msra.mxu0 %v894
    %1111 = vmatpush.bf16.msra.mxu0 %v891
    %1112 = vmatpush.bf16.msra.mxu0 %v888
    %1113 = vmatpush.bf16.msra.mxu0 %v885
    %1114 = vmatpush.bf16.msra.mxu0 %v882
    %1115 = vmatpush.bf16.msra.mxu0 %v879
    %1116 = vmatpush.bf16.msra.mxu0 %v876
    %1117 = vmatmul.bf16.gmra.mxu0 %v269
    %v1118 = vpop.f32.mrf.mxu0
    %v1119 = vadd.f32 %v1106, %v1118
    %v1120 = vpop.f32.mrf.mxu0
    %1121 = vdwg.mxu0
    %1122 = vmatpush.bf16.msra.mxu0 %v778
    %1123 = vmatpush.bf16.msra.mxu0 %v775
    %1124 = vmatpush.bf16.msra.mxu0 %v772
    %1125 = vmatpush.bf16.msra.mxu0 %v769
    %1126 = vmatpush.bf16.msra.mxu0 %v766
    %1127 = vmatpush.bf16.msra.mxu0 %v763
    %1128 = vmatpush.bf16.msra.mxu0 %v760
    %1129 = vmatpush.bf16.msra.mxu0 %v757
    %1130 = vmatmul.bf16.gmra.mxu0 %v264
    %v1131 = vpop.f32.mrf.mxu0
    %v1132 = vadd.f32 0.0, %v1131
    %v1133 = vpop.f32.mrf.mxu0
    %1134 = vdwg.mxu0
    %1135 = vmatpush.bf16.msra.mxu0 %v802
    %1136 = vmatpush.bf16.msra.mxu0 %v799
    %1137 = vmatpush.bf16.msra.mxu0 %v796
    %1138 = vmatpush.bf16.msra.mxu0 %v793
    %1139 = vmatpush.bf16.msra.mxu0 %v790
    %1140 = vmatpush.bf16.msra.mxu0 %v787
    %1141 = vmatpush.bf16.msra.mxu0 %v784
    %1142 = vmatpush.bf16.msra.mxu0 %v781
    %1143 = vmatmul.bf16.gmra.mxu0 %v265
    %v1144 = vpop.f32.mrf.mxu0
    %v1145 = vadd.f32 %v1132, %v1144
    %v1146 = vpop.f32.mrf.mxu0
    %1147 = vdwg.mxu0
    %1148 = vmatpush.bf16.msra.mxu0 %v826
    %1149 = vmatpush.bf16.msra.mxu0 %v823
    %1150 = vmatpush.bf16.msra.mxu0 %v820
    %1151 = vmatpush.bf16.msra.mxu0 %v817
    %1152 = vmatpush.bf16.msra.mxu0 %v814
    %1153 = vmatpush.bf16.msra.mxu0 %v811
    %1154 = vmatpush.bf16.msra.mxu0 %v808
    %1155 = vmatpush.bf16.msra.mxu0 %v805
    %1156 = vmatmul.bf16.gmra.mxu0 %v266
    %v1157 = vpop.f32.mrf.mxu0
    %v1158 = vadd.f32 %v1145, %v1157
    %v1159 = vpop.f32.mrf.mxu0
    %1160 = vdwg.mxu0
    %1161 = vmatpush.bf16.msra.mxu0 %v850
    %1162 = vmatpush.bf16.msra.mxu0 %v847
    %1163 = vmatpush.bf16.msra.mxu0 %v844
    %1164 = vmatpush.bf16.msra.mxu0 %v841
    %1165 = vmatpush.bf16.msra.mxu0 %v838
    %1166 = vmatpush.bf16.msra.mxu0 %v835
    %1167 = vmatpush.bf16.msra.mxu0 %v832
    %1168 = vmatpush.bf16.msra.mxu0 %v829
    %1169 = vmatmul.bf16.gmra.mxu0 %v267
    %v1170 = vpop.f32.mrf.mxu0
    %v1171 = vadd.f32 %v1158, %v1170
    %v1172 = vpop.f32.mrf.mxu0
    %1173 = vdwg.mxu0
    %1174 = vmatpush.bf16.msra.mxu0 %v874
    %1175 = vmatpush.bf16.msra.mxu0 %v871
    %1176 = vmatpush.bf16.msra.mxu0 %v868
    %1177 = vmatpush.bf16.msra.mxu0 %v865
    %1178 = vmatpush.bf16.msra.mxu0 %v862
    %1179 = vmatpush.bf16.msra.mxu0 %v859
    %1180 = vmatpush.bf16.msra.mxu0 %v856
    %1181 = vmatpush.bf16.msra.mxu0 %v853
    %1182 = vmatmul.bf16.gmra.mxu0 %v268
    %v1183 = vpop.f32.mrf.mxu0
    %v1184 = vadd.f32 %v1171, %v1183
    %v1185 = vpop.f32.mrf.mxu0
    %1186 = vdwg.mxu0
    %1187 = vmatpush.bf16.msra.mxu0 %v898
    %1188 = vmatpush.bf16.msra.mxu0 %v895
    %1189 = vmatpush.bf16.msra.mxu0 %v892
    %1190 = vmatpush.bf16.msra.mxu0 %v889
    %1191 = vmatpush.bf16.msra.mxu0 %v886
    %1192 = vmatpush.bf16.msra.mxu0 %v883
    %1193 = vmatpush.bf16.msra.mxu0 %v880
    %1194 = vmatpush.bf16.msra.mxu0 %v877
    %1195 = vmatmul.bf16.gmra.mxu0 %v269
    %v1196 = vpop.f32.mrf.mxu0
    %v1197 = vadd.f32 %v1184, %v1196
    %v1198 = vpop.f32.mrf.mxu0
    %1199 = vdwg.mxu0
    %1200 = vmatpush.bf16.msra.mxu0 %v779
    %1201 = vmatpush.bf16.msra.mxu0 %v776
    %1202 = vmatpush.bf16.msra.mxu0 %v773
    %1203 = vmatpush.bf16.msra.mxu0 %v770
    %1204 = vmatpush.bf16.msra.mxu0 %v767
    %1205 = vmatpush.bf16.msra.mxu0 %v764
    %1206 = vmatpush.bf16.msra.mxu0 %v761
    %1207 = vmatpush.bf16.msra.mxu0 %v758
    %1208 = vmatmul.bf16.gmra.mxu0 %v264
    %v1209 = vpop.f32.mrf.mxu0
    %v1210 = vadd.f32 0.0, %v1209
    %v1211 = vpop.f32.mrf.mxu0
    %1212 = vdwg.mxu0
    %1213 = vmatpush.bf16.msra.mxu0 %v803
    %1214 = vmatpush.bf16.msra.mxu0 %v800
    %1215 = vmatpush.bf16.msra.mxu0 %v797
    %1216 = vmatpush.bf16.msra.mxu0 %v794
    %1217 = vmatpush.bf16.msra.mxu0 %v791
    %1218 = vmatpush.bf16.msra.mxu0 %v788
    %1219 = vmatpush.bf16.msra.mxu0 %v785
    %1220 = vmatpush.bf16.msra.mxu0 %v782
    %1221 = vmatmul.bf16.gmra.mxu0 %v265
    %v1222 = vpop.f32.mrf.mxu0
    %v1223 = vadd.f32 %v1210, %v1222
    %v1224 = vpop.f32.mrf.mxu0
    %1225 = vdwg.mxu0
    %1226 = vmatpush.bf16.msra.mxu0 %v827
    %1227 = vmatpush.bf16.msra.mxu0 %v824
    %1228 = vmatpush.bf16.msra.mxu0 %v821
    %1229 = vmatpush.bf16.msra.mxu0 %v818
    %1230 = vmatpush.bf16.msra.mxu0 %v815
    %1231 = vmatpush.bf16.msra.mxu0 %v812
    %1232 = vmatpush.bf16.msra.mxu0 %v809
    %1233 = vmatpush.bf16.msra.mxu0 %v806
    %1234 = vmatmul.bf16.gmra.mxu0 %v266
    %v1235 = vpop.f32.mrf.mxu0
    %v1236 = vadd.f32 %v1223, %v1235
    %v1237 = vpop.f32.mrf.mxu0
    %1238 = vdwg.mxu0
    %1239 = vmatpush.bf16.msra.mxu0 %v851
    %1240 = vmatpush.bf16.msra.mxu0 %v848
    %1241 = vmatpush.bf16.msra.mxu0 %v845
    %1242 = vmatpush.bf16.msra.mxu0 %v842
    %1243 = vmatpush.bf16.msra.mxu0 %v839
    %1244 = vmatpush.bf16.msra.mxu0 %v836
    %1245 = vmatpush.bf16.msra.mxu0 %v833
    %1246 = vmatpush.bf16.msra.mxu0 %v830
    %1247 = vmatmul.bf16.gmra.mxu0 %v267
    %v1248 = vpop.f32.mrf.mxu0
    %v1249 = vadd.f32 %v1236, %v1248
    %v1250 = vpop.f32.mrf.mxu0
    %1251 = vdwg.mxu0
    %1252 = vmatpush.bf16.msra.mxu0 %v875
    %1253 = vmatpush.bf16.msra.mxu0 %v872
    %1254 = vmatpush.bf16.msra.mxu0 %v869
    %1255 = vmatpush.bf16.msra.mxu0 %v866
    %1256 = vmatpush.bf16.msra.mxu0 %v863
    %1257 = vmatpush.bf16.msra.mxu0 %v860
    %1258 = vmatpush.bf16.msra.mxu0 %v857
    %1259 = vmatpush.bf16.msra.mxu0 %v854
    %1260 = vmatmul.bf16.gmra.mxu0 %v268
    %v1261 = vpop.f32.mrf.mxu0
    %v1262 = vadd.f32 %v1249, %v1261
    %v1263 = vpop.f32.mrf.mxu0
    %1264 = vdwg.mxu0
    %1265 = vmatpush.bf16.msra.mxu0 %v899
    %1266 = vmatpush.bf16.msra.mxu0 %v896
    %1267 = vmatpush.bf16.msra.mxu0 %v893
    %1268 = vmatpush.bf16.msra.mxu0 %v890
    %1269 = vmatpush.bf16.msra.mxu0 %v887
    %1270 = vmatpush.bf16.msra.mxu0 %v884
    %1271 = vmatpush.bf16.msra.mxu0 %v881
    %1272 = vmatpush.bf16.msra.mxu0 %v878
    %1273 = vmatmul.bf16.gmra.mxu0 %v269
    %v1274 = vpop.f32.mrf.mxu0
    %v1275 = vadd.f32 %v1262, %v1274
    %v1276 = vpop.f32.mrf.mxu0
    %1277 = vdwg.mxu0
    %v1278 = vmax.f32 %v1119, 0.0
    %v1279 = vmax.f32 %v1197, 0.0
    %v1280 = vmax.f32 %v1275, 0.0
    %v1281 = vpack.c.bf16 %v1278, %v1278
    %v1282 = vpack.c.bf16 %v1279, %v1279
    %v1283 = vpack.c.bf16 %v1280, %v1280
    %v1284 = vld [vmem:[#allocation7] sm:$0xff]
    %v1285 = vld [vmem:[#allocation7 + $0x8] sm:$0xff]
    %v1286 = vld [vmem:[#allocation7 + $0x10] sm:$0xff]
    %v1287 = vld [vmem:[#allocation7 + $0x18] sm:$0xff]
    %v1288 = vld [vmem:[#allocation7 + $0x20] sm:$0xff]
    %v1289 = vld [vmem:[#allocation7 + $0x28] sm:$0xff]
    %v1290 = vld [vmem:[#allocation7 + $0x30] sm:$0xff]
    %v1291 = vld [vmem:[#allocation7 + $0x38] sm:$0xff]
    %v1292 = vld [vmem:[#allocation7 + $0x40] sm:$0xff]
    %v1293 = vld [vmem:[#allocation7 + $0x48] sm:$0xff]
    %v1294 = vld [vmem:[#allocation7 + $0x50] sm:$0xff]
    %v1295 = vld [vmem:[#allocation7 + $0x58] sm:$0xff]
    %v1296 = vld [vmem:[#allocation7 + $0x60] sm:$0xff]
    %v1297 = vld [vmem:[#allocation7 + $0x68] sm:$0xff]
    %v1298 = vld [vmem:[#allocation7 + $0x70] sm:$0xff]
    %v1299 = vld [vmem:[#allocation7 + $0x78] sm:$0xff]
    %v1300 = vld [vmem:[#allocation7 + $0x80] sm:$0xff]
    %v1301 = vld [vmem:[#allocation7 + $0x88] sm:$0xff]
    %v1302 = vld [vmem:[#allocation7 + $0x90] sm:$0xff]
    %v1303 = vld [vmem:[#allocation7 + $0x98] sm:$0xff]
    %v1304 = vld [vmem:[#allocation7 + $0xa0] sm:$0xff]
    %v1305 = vld [vmem:[#allocation7 + $0xa8] sm:$0xff]
    %v1306 = vld [vmem:[#allocation7 + $0xb0] sm:$0xff]
    %v1307 = vld [vmem:[#allocation7 + $0xb8] sm:$0xff]
    %v1308 = vld [vmem:[#allocation7 + $0xc0] sm:$0xff]
    %v1309 = vld [vmem:[#allocation7 + $0xc8] sm:$0xff]
    %v1310 = vld [vmem:[#allocation7 + $0xd0] sm:$0xff]
    %v1311 = vld [vmem:[#allocation7 + $0xd8] sm:$0xff]
    %v1312 = vld [vmem:[#allocation7 + $0xe0] sm:$0xff]
    %v1313 = vld [vmem:[#allocation7 + $0xe8] sm:$0xff]
    %v1314 = vld [vmem:[#allocation7 + $0xf0] sm:$0xff]
    %v1315 = vld [vmem:[#allocation7 + $0xf8] sm:$0xff]
    %v1316 = vld [vmem:[#allocation7 + $0x100] sm:$0xff]
    %v1317 = vld [vmem:[#allocation7 + $0x108] sm:$0xff]
    %v1318 = vld [vmem:[#allocation7 + $0x110] sm:$0xff]
    %v1319 = vld [vmem:[#allocation7 + $0x118] sm:$0xff]
    %v1320 = vld [vmem:[#allocation7 + $0x120] sm:$0xff]
    %v1321 = vld [vmem:[#allocation7 + $0x128] sm:$0xff]
    %v1322 = vld [vmem:[#allocation7 + $0x130] sm:$0xff]
    %v1323 = vld [vmem:[#allocation7 + $0x138] sm:$0xff]
    %v1324 = vld [vmem:[#allocation7 + $0x140] sm:$0xff]
    %v1325 = vld [vmem:[#allocation7 + $0x148] sm:$0xff]
    %v1326 = vld [vmem:[#allocation7 + $0x150] sm:$0xff]
    %v1327 = vld [vmem:[#allocation7 + $0x158] sm:$0xff]
    %v1328 = vld [vmem:[#allocation7 + $0x160] sm:$0xff]
    %v1329 = vld [vmem:[#allocation7 + $0x168] sm:$0xff]
    %v1330 = vld [vmem:[#allocation7 + $0x170] sm:$0xff]
    %v1331 = vld [vmem:[#allocation7 + $0x178] sm:$0xff]
    %v1332 = vld [vmem:[#allocation7 + $0x180] sm:$0xff]
    %v1333 = vld [vmem:[#allocation7 + $0x188] sm:$0xff]
    %v1334 = vld [vmem:[#allocation7 + $0x190] sm:$0xff]
    %v1335 = vld [vmem:[#allocation7 + $0x198] sm:$0xff]
    %v1336 = vld [vmem:[#allocation7 + $0x1a0] sm:$0xff]
    %v1337 = vld [vmem:[#allocation7 + $0x1a8] sm:$0xff]
    %v1338 = vld [vmem:[#allocation7 + $0x1b0] sm:$0xff]
    %v1339 = vld [vmem:[#allocation7 + $0x1b8] sm:$0xff]
    %v1340 = vld [vmem:[#allocation7 + $0x1c0] sm:$0xff]
    %v1341 = vld [vmem:[#allocation7 + $0x1c8] sm:$0xff]
    %v1342 = vld [vmem:[#allocation7 + $0x1d0] sm:$0xff]
    %v1343 = vld [vmem:[#allocation7 + $0x1d8] sm:$0xff]
    %v1344 = vld [vmem:[#allocation7 + $0x1e0] sm:$0xff]
    %v1345 = vld [vmem:[#allocation7 + $0x1e8] sm:$0xff]
    %v1346 = vld [vmem:[#allocation7 + $0x1f0] sm:$0xff]
    %v1347 = vld [vmem:[#allocation7 + $0x1f8] sm:$0xff]
    %v1348 = vld [vmem:[#allocation7 + $0x200] sm:$0xff]
    %v1349 = vld [vmem:[#allocation7 + $0x208] sm:$0xff]
    %v1350 = vld [vmem:[#allocation7 + $0x210] sm:$0xff]
    %v1351 = vld [vmem:[#allocation7 + $0x218] sm:$0xff]
    %v1352 = vld [vmem:[#allocation7 + $0x220] sm:$0xff]
    %v1353 = vld [vmem:[#allocation7 + $0x228] sm:$0xff]
    %v1354 = vld [vmem:[#allocation7 + $0x230] sm:$0xff]
    %v1355 = vld [vmem:[#allocation7 + $0x238] sm:$0xff]
    %v1356 = vld [vmem:[#allocation7 + $0x240] sm:$0xff]
    %v1357 = vld [vmem:[#allocation7 + $0x248] sm:$0xff]
    %v1358 = vld [vmem:[#allocation7 + $0x250] sm:$0xff]
    %v1359 = vld [vmem:[#allocation7 + $0x258] sm:$0xff]
    %v1360 = vld [vmem:[#allocation7 + $0x260] sm:$0xff]
    %v1361 = vld [vmem:[#allocation7 + $0x268] sm:$0xff]
    %v1362 = vld [vmem:[#allocation7 + $0x270] sm:$0xff]
    %v1363 = vld [vmem:[#allocation7 + $0x278] sm:$0xff]
    %v1364 = vld [vmem:[#allocation7 + $0x280] sm:$0xff]
    %v1365 = vld [vmem:[#allocation7 + $0x288] sm:$0xff]
    %v1366 = vld [vmem:[#allocation7 + $0x290] sm:$0xff]
    %v1367 = vld [vmem:[#allocation7 + $0x298] sm:$0xff]
    %v1368 = vld [vmem:[#allocation7 + $0x2a0] sm:$0xff]
    %v1369 = vld [vmem:[#allocation7 + $0x2a8] sm:$0xff]
    %v1370 = vld [vmem:[#allocation7 + $0x2b0] sm:$0xff]
    %v1371 = vld [vmem:[#allocation7 + $0x2b8] sm:$0xff]
    %v1372 = vld [vmem:[#allocation7 + $0x2c0] sm:$0xff]
    %v1373 = vld [vmem:[#allocation7 + $0x2c8] sm:$0xff]
    %v1374 = vld [vmem:[#allocation7 + $0x2d0] sm:$0xff]
    %v1375 = vld [vmem:[#allocation7 + $0x2d8] sm:$0xff]
    %v1376 = vld [vmem:[#allocation7 + $0x2e0] sm:$0xff]
    %v1377 = vld [vmem:[#allocation7 + $0x2e8] sm:$0xff]
    %v1378 = vld [vmem:[#allocation7 + $0x2f0] sm:$0xff]
    %v1379 = vld [vmem:[#allocation7 + $0x2f8] sm:$0xff]
    %v1380 = vld [vmem:[#allocation7 + $0x300] sm:$0xff]
    %v1381 = vld [vmem:[#allocation7 + $0x308] sm:$0xff]
    %v1382 = vld [vmem:[#allocation7 + $0x310] sm:$0xff]
    %v1383 = vld [vmem:[#allocation7 + $0x318] sm:$0xff]
    %v1384 = vld [vmem:[#allocation7 + $0x320] sm:$0xff]
    %v1385 = vld [vmem:[#allocation7 + $0x328] sm:$0xff]
    %v1386 = vld [vmem:[#allocation7 + $0x330] sm:$0xff]
    %v1387 = vld [vmem:[#allocation7 + $0x338] sm:$0xff]
    %v1388 = vld [vmem:[#allocation7 + $0x340] sm:$0xff]
    %v1389 = vld [vmem:[#allocation7 + $0x348] sm:$0xff]
    %v1390 = vld [vmem:[#allocation7 + $0x350] sm:$0xff]
    %v1391 = vld [vmem:[#allocation7 + $0x358] sm:$0xff]
    %v1392 = vld [vmem:[#allocation7 + $0x360] sm:$0xff]
    %v1393 = vld [vmem:[#allocation7 + $0x368] sm:$0xff]
    %v1394 = vld [vmem:[#allocation7 + $0x370] sm:$0xff]
    %v1395 = vld [vmem:[#allocation7 + $0x378] sm:$0xff]
    %v1396 = vld [vmem:[#allocation7 + $0x380] sm:$0xff]
    %v1397 = vld [vmem:[#allocation7 + $0x388] sm:$0xff]
    %v1398 = vld [vmem:[#allocation7 + $0x390] sm:$0xff]
    %v1399 = vld [vmem:[#allocation7 + $0x398] sm:$0xff]
    %v1400 = vld [vmem:[#allocation7 + $0x3a0] sm:$0xff]
    %v1401 = vld [vmem:[#allocation7 + $0x3a8] sm:$0xff]
    %v1402 = vld [vmem:[#allocation7 + $0x3b0] sm:$0xff]
    %v1403 = vld [vmem:[#allocation7 + $0x3b8] sm:$0xff]
    %v1404 = vld [vmem:[#allocation7 + $0x3c0] sm:$0xff]
    %v1405 = vld [vmem:[#allocation7 + $0x3c8] sm:$0xff]
    %v1406 = vld [vmem:[#allocation7 + $0x3d0] sm:$0xff]
    %v1407 = vld [vmem:[#allocation7 + $0x3d8] sm:$0xff]
    %v1408 = vld [vmem:[#allocation7 + $0x3e0] sm:$0xff]
    %v1409 = vld [vmem:[#allocation7 + $0x3e8] sm:$0xff]
    %v1410 = vld [vmem:[#allocation7 + $0x3f0] sm:$0xff]
    %v1411 = vld [vmem:[#allocation7 + $0x3f8] sm:$0xff]
    %v1412 = vld [vmem:[#allocation7 + $0x400] sm:$0xff]
    %v1413 = vld [vmem:[#allocation7 + $0x408] sm:$0xff]
    %v1414 = vld [vmem:[#allocation7 + $0x410] sm:$0xff]
    %v1415 = vld [vmem:[#allocation7 + $0x418] sm:$0xff]
    %v1416 = vld [vmem:[#allocation7 + $0x420] sm:$0xff]
    %v1417 = vld [vmem:[#allocation7 + $0x428] sm:$0xff]
    %v1418 = vld [vmem:[#allocation7 + $0x430] sm:$0xff]
    %v1419 = vld [vmem:[#allocation7 + $0x438] sm:$0xff]
    %v1420 = vld [vmem:[#allocation7 + $0x440] sm:$0xff]
    %v1421 = vld [vmem:[#allocation7 + $0x448] sm:$0xff]
    %v1422 = vld [vmem:[#allocation7 + $0x450] sm:$0xff]
    %v1423 = vld [vmem:[#allocation7 + $0x458] sm:$0xff]
    %v1424 = vld [vmem:[#allocation7 + $0x460] sm:$0xff]
    %v1425 = vld [vmem:[#allocation7 + $0x468] sm:$0xff]
    %v1426 = vld [vmem:[#allocation7 + $0x470] sm:$0xff]
    %v1427 = vld [vmem:[#allocation7 + $0x478] sm:$0xff]
    %v1572 = vunpack.c.l.b16 %v1284
    %v1573 = vunpack.c.h.b16 %v1284
    %v1574 = vunpack.c.l.b16 %v1285
    %v1575 = vunpack.c.h.b16 %v1285
    %v1576 = vunpack.c.l.b16 %v1286
    %v1577 = vunpack.c.h.b16 %v1286
    %v1578 = vunpack.c.l.b16 %v1287
    %v1579 = vunpack.c.h.b16 %v1287
    %v1580 = vunpack.c.l.b16 %v1288
    %v1581 = vunpack.c.h.b16 %v1288
    %v1582 = vunpack.c.l.b16 %v1289
    %v1583 = vunpack.c.h.b16 %v1289
    %v1584 = vunpack.c.l.b16 %v1290
    %v1585 = vunpack.c.h.b16 %v1290
    %v1586 = vunpack.c.l.b16 %v1291
    %v1587 = vunpack.c.h.b16 %v1291
    %v1588 = vunpack.c.l.b16 %v1292
    %v1589 = vunpack.c.h.b16 %v1292
    %v1590 = vunpack.c.l.b16 %v1293
    %v1591 = vunpack.c.h.b16 %v1293
    %v1592 = vunpack.c.l.b16 %v1294
    %v1593 = vunpack.c.h.b16 %v1294
    %v1594 = vunpack.c.l.b16 %v1295
    %v1595 = vunpack.c.h.b16 %v1295
    %v1596 = vunpack.c.l.b16 %v1296
    %v1597 = vunpack.c.h.b16 %v1296
    %v1598 = vunpack.c.l.b16 %v1297
    %v1599 = vunpack.c.h.b16 %v1297
    %v1600 = vunpack.c.l.b16 %v1298
    %v1601 = vunpack.c.h.b16 %v1298
    %v1602 = vunpack.c.l.b16 %v1299
    %v1603 = vunpack.c.h.b16 %v1299
    %v1604 = vunpack.c.l.b16 %v1300
    %v1605 = vunpack.c.h.b16 %v1300
    %v1606 = vunpack.c.l.b16 %v1301
    %v1607 = vunpack.c.h.b16 %v1301
    %v1608 = vunpack.c.l.b16 %v1302
    %v1609 = vunpack.c.h.b16 %v1302
    %v1610 = vunpack.c.l.b16 %v1303
    %v1611 = vunpack.c.h.b16 %v1303
    %v1612 = vunpack.c.l.b16 %v1304
    %v1613 = vunpack.c.h.b16 %v1304
    %v1614 = vunpack.c.l.b16 %v1305
    %v1615 = vunpack.c.h.b16 %v1305
    %v1616 = vunpack.c.l.b16 %v1306
    %v1617 = vunpack.c.h.b16 %v1306
    %v1618 = vunpack.c.l.b16 %v1307
    %v1619 = vunpack.c.h.b16 %v1307
    %v1620 = vunpack.c.l.b16 %v1308
    %v1621 = vunpack.c.h.b16 %v1308
    %v1622 = vunpack.c.l.b16 %v1309
    %v1623 = vunpack.c.h.b16 %v1309
    %v1624 = vunpack.c.l.b16 %v1310
    %v1625 = vunpack.c.h.b16 %v1310
    %v1626 = vunpack.c.l.b16 %v1311
    %v1627 = vunpack.c.h.b16 %v1311
    %v1628 = vunpack.c.l.b16 %v1312
    %v1629 = vunpack.c.h.b16 %v1312
    %v1630 = vunpack.c.l.b16 %v1313
    %v1631 = vunpack.c.h.b16 %v1313
    %v1632 = vunpack.c.l.b16 %v1314
    %v1633 = vunpack.c.h.b16 %v1314
    %v1634 = vunpack.c.l.b16 %v1315
    %v1635 = vunpack.c.h.b16 %v1315
    %v1636 = vunpack.c.l.b16 %v1316
    %v1637 = vunpack.c.h.b16 %v1316
    %v1638 = vunpack.c.l.b16 %v1317
    %v1639 = vunpack.c.h.b16 %v1317
    %v1640 = vunpack.c.l.b16 %v1318
    %v1641 = vunpack.c.h.b16 %v1318
    %v1642 = vunpack.c.l.b16 %v1319
    %v1643 = vunpack.c.h.b16 %v1319
    %v1644 = vunpack.c.l.b16 %v1320
    %v1645 = vunpack.c.h.b16 %v1320
    %v1646 = vunpack.c.l.b16 %v1321
    %v1647 = vunpack.c.h.b16 %v1321
    %v1648 = vunpack.c.l.b16 %v1322
    %v1649 = vunpack.c.h.b16 %v1322
    %v1650 = vunpack.c.l.b16 %v1323
    %v1651 = vunpack.c.h.b16 %v1323
    %v1652 = vunpack.c.l.b16 %v1324
    %v1653 = vunpack.c.h.b16 %v1324
    %v1654 = vunpack.c.l.b16 %v1325
    %v1655 = vunpack.c.h.b16 %v1325
    %v1656 = vunpack.c.l.b16 %v1326
    %v1657 = vunpack.c.h.b16 %v1326
    %v1658 = vunpack.c.l.b16 %v1327
    %v1659 = vunpack.c.h.b16 %v1327
    %v1660 = vunpack.c.l.b16 %v1328
    %v1661 = vunpack.c.h.b16 %v1328
    %v1662 = vunpack.c.l.b16 %v1329
    %v1663 = vunpack.c.h.b16 %v1329
    %v1664 = vunpack.c.l.b16 %v1330
    %v1665 = vunpack.c.h.b16 %v1330
    %v1666 = vunpack.c.l.b16 %v1331
    %v1667 = vunpack.c.h.b16 %v1331
    %v1668 = vunpack.c.l.b16 %v1332
    %v1669 = vunpack.c.h.b16 %v1332
    %v1670 = vunpack.c.l.b16 %v1333
    %v1671 = vunpack.c.h.b16 %v1333
    %v1672 = vunpack.c.l.b16 %v1334
    %v1673 = vunpack.c.h.b16 %v1334
    %v1674 = vunpack.c.l.b16 %v1335
    %v1675 = vunpack.c.h.b16 %v1335
    %v1676 = vunpack.c.l.b16 %v1336
    %v1677 = vunpack.c.h.b16 %v1336
    %v1678 = vunpack.c.l.b16 %v1337
    %v1679 = vunpack.c.h.b16 %v1337
    %v1680 = vunpack.c.l.b16 %v1338
    %v1681 = vunpack.c.h.b16 %v1338
    %v1682 = vunpack.c.l.b16 %v1339
    %v1683 = vunpack.c.h.b16 %v1339
    %v1684 = vunpack.c.l.b16 %v1340
    %v1685 = vunpack.c.h.b16 %v1340
    %v1686 = vunpack.c.l.b16 %v1341
    %v1687 = vunpack.c.h.b16 %v1341
    %v1688 = vunpack.c.l.b16 %v1342
    %v1689 = vunpack.c.h.b16 %v1342
    %v1690 = vunpack.c.l.b16 %v1343
    %v1691 = vunpack.c.h.b16 %v1343
    %v1692 = vunpack.c.l.b16 %v1344
    %v1693 = vunpack.c.h.b16 %v1344
    %v1694 = vunpack.c.l.b16 %v1345
    %v1695 = vunpack.c.h.b16 %v1345
    %v1696 = vunpack.c.l.b16 %v1346
    %v1697 = vunpack.c.h.b16 %v1346
    %v1698 = vunpack.c.l.b16 %v1347
    %v1699 = vunpack.c.h.b16 %v1347
    %v1700 = vunpack.c.l.b16 %v1348
    %v1701 = vunpack.c.h.b16 %v1348
    %v1702 = vunpack.c.l.b16 %v1349
    %v1703 = vunpack.c.h.b16 %v1349
    %v1704 = vunpack.c.l.b16 %v1350
    %v1705 = vunpack.c.h.b16 %v1350
    %v1706 = vunpack.c.l.b16 %v1351
    %v1707 = vunpack.c.h.b16 %v1351
    %v1708 = vunpack.c.l.b16 %v1352
    %v1709 = vunpack.c.h.b16 %v1352
    %v1710 = vunpack.c.l.b16 %v1353
    %v1711 = vunpack.c.h.b16 %v1353
    %v1712 = vunpack.c.l.b16 %v1354
    %v1713 = vunpack.c.h.b16 %v1354
    %v1714 = vunpack.c.l.b16 %v1355
    %v1715 = vunpack.c.h.b16 %v1355
    %v1716 = vunpack.c.l.b16 %v1356
    %v1717 = vunpack.c.h.b16 %v1356
    %v1718 = vunpack.c.l.b16 %v1357
    %v1719 = vunpack.c.h.b16 %v1357
    %v1720 = vunpack.c.l.b16 %v1358
    %v1721 = vunpack.c.h.b16 %v1358
    %v1722 = vunpack.c.l.b16 %v1359
    %v1723 = vunpack.c.h.b16 %v1359
    %v1724 = vunpack.c.l.b16 %v1360
    %v1725 = vunpack.c.h.b16 %v1360
    %v1726 = vunpack.c.l.b16 %v1361
    %v1727 = vunpack.c.h.b16 %v1361
    %v1728 = vunpack.c.l.b16 %v1362
    %v1729 = vunpack.c.h.b16 %v1362
    %v1730 = vunpack.c.l.b16 %v1363
    %v1731 = vunpack.c.h.b16 %v1363
    %v1732 = vunpack.c.l.b16 %v1364
    %v1733 = vunpack.c.h.b16 %v1364
    %v1734 = vunpack.c.l.b16 %v1365
    %v1735 = vunpack.c.h.b16 %v1365
    %v1736 = vunpack.c.l.b16 %v1366
    %v1737 = vunpack.c.h.b16 %v1366
    %v1738 = vunpack.c.l.b16 %v1367
    %v1739 = vunpack.c.h.b16 %v1367
    %v1740 = vunpack.c.l.b16 %v1368
    %v1741 = vunpack.c.h.b16 %v1368
    %v1742 = vunpack.c.l.b16 %v1369
    %v1743 = vunpack.c.h.b16 %v1369
    %v1744 = vunpack.c.l.b16 %v1370
    %v1745 = vunpack.c.h.b16 %v1370
    %v1746 = vunpack.c.l.b16 %v1371
    %v1747 = vunpack.c.h.b16 %v1371
    %v1748 = vunpack.c.l.b16 %v1372
    %v1749 = vunpack.c.h.b16 %v1372
    %v1750 = vunpack.c.l.b16 %v1373
    %v1751 = vunpack.c.h.b16 %v1373
    %v1752 = vunpack.c.l.b16 %v1374
    %v1753 = vunpack.c.h.b16 %v1374
    %v1754 = vunpack.c.l.b16 %v1375
    %v1755 = vunpack.c.h.b16 %v1375
    %v1756 = vunpack.c.l.b16 %v1376
    %v1757 = vunpack.c.h.b16 %v1376
    %v1758 = vunpack.c.l.b16 %v1377
    %v1759 = vunpack.c.h.b16 %v1377
    %v1760 = vunpack.c.l.b16 %v1378
    %v1761 = vunpack.c.h.b16 %v1378
    %v1762 = vunpack.c.l.b16 %v1379
    %v1763 = vunpack.c.h.b16 %v1379
    %v1764 = vunpack.c.l.b16 %v1380
    %v1765 = vunpack.c.h.b16 %v1380
    %v1766 = vunpack.c.l.b16 %v1381
    %v1767 = vunpack.c.h.b16 %v1381
    %v1768 = vunpack.c.l.b16 %v1382
    %v1769 = vunpack.c.h.b16 %v1382
    %v1770 = vunpack.c.l.b16 %v1383
    %v1771 = vunpack.c.h.b16 %v1383
    %v1772 = vunpack.c.l.b16 %v1384
    %v1773 = vunpack.c.h.b16 %v1384
    %v1774 = vunpack.c.l.b16 %v1385
    %v1775 = vunpack.c.h.b16 %v1385
    %v1776 = vunpack.c.l.b16 %v1386
    %v1777 = vunpack.c.h.b16 %v1386
    %v1778 = vunpack.c.l.b16 %v1387
    %v1779 = vunpack.c.h.b16 %v1387
    %v1780 = vunpack.c.l.b16 %v1388
    %v1781 = vunpack.c.h.b16 %v1388
    %v1782 = vunpack.c.l.b16 %v1389
    %v1783 = vunpack.c.h.b16 %v1389
    %v1784 = vunpack.c.l.b16 %v1390
    %v1785 = vunpack.c.h.b16 %v1390
    %v1786 = vunpack.c.l.b16 %v1391
    %v1787 = vunpack.c.h.b16 %v1391
    %v1788 = vunpack.c.l.b16 %v1392
    %v1789 = vunpack.c.h.b16 %v1392
    %v1790 = vunpack.c.l.b16 %v1393
    %v1791 = vunpack.c.h.b16 %v1393
    %v1792 = vunpack.c.l.b16 %v1394
    %v1793 = vunpack.c.h.b16 %v1394
    %v1794 = vunpack.c.l.b16 %v1395
    %v1795 = vunpack.c.h.b16 %v1395
    %v1796 = vunpack.c.l.b16 %v1396
    %v1797 = vunpack.c.h.b16 %v1396
    %v1798 = vunpack.c.l.b16 %v1397
    %v1799 = vunpack.c.h.b16 %v1397
    %v1800 = vunpack.c.l.b16 %v1398
    %v1801 = vunpack.c.h.b16 %v1398
    %v1802 = vunpack.c.l.b16 %v1399
    %v1803 = vunpack.c.h.b16 %v1399
    %v1804 = vunpack.c.l.b16 %v1400
    %v1805 = vunpack.c.h.b16 %v1400
    %v1806 = vunpack.c.l.b16 %v1401
    %v1807 = vunpack.c.h.b16 %v1401
    %v1808 = vunpack.c.l.b16 %v1402
    %v1809 = vunpack.c.h.b16 %v1402
    %v1810 = vunpack.c.l.b16 %v1403
    %v1811 = vunpack.c.h.b16 %v1403
    %v1812 = vunpack.c.l.b16 %v1404
    %v1813 = vunpack.c.h.b16 %v1404
    %v1814 = vunpack.c.l.b16 %v1405
    %v1815 = vunpack.c.h.b16 %v1405
    %v1816 = vunpack.c.l.b16 %v1406
    %v1817 = vunpack.c.h.b16 %v1406
    %v1818 = vunpack.c.l.b16 %v1407
    %v1819 = vunpack.c.h.b16 %v1407
    %v1820 = vunpack.c.l.b16 %v1408
    %v1821 = vunpack.c.h.b16 %v1408
    %v1822 = vunpack.c.l.b16 %v1409
    %v1823 = vunpack.c.h.b16 %v1409
    %v1824 = vunpack.c.l.b16 %v1410
    %v1825 = vunpack.c.h.b16 %v1410
    %v1826 = vunpack.c.l.b16 %v1411
    %v1827 = vunpack.c.h.b16 %v1411
    %v1828 = vunpack.c.l.b16 %v1412
    %v1829 = vunpack.c.h.b16 %v1412
    %v1830 = vunpack.c.l.b16 %v1413
    %v1831 = vunpack.c.h.b16 %v1413
    %v1832 = vunpack.c.l.b16 %v1414
    %v1833 = vunpack.c.h.b16 %v1414
    %v1834 = vunpack.c.l.b16 %v1415
    %v1835 = vunpack.c.h.b16 %v1415
    %v1836 = vunpack.c.l.b16 %v1416
    %v1837 = vunpack.c.h.b16 %v1416
    %v1838 = vunpack.c.l.b16 %v1417
    %v1839 = vunpack.c.h.b16 %v1417
    %v1840 = vunpack.c.l.b16 %v1418
    %v1841 = vunpack.c.h.b16 %v1418
    %v1842 = vunpack.c.l.b16 %v1419
    %v1843 = vunpack.c.h.b16 %v1419
    %v1844 = vunpack.c.l.b16 %v1420
    %v1845 = vunpack.c.h.b16 %v1420
    %v1846 = vunpack.c.l.b16 %v1421
    %v1847 = vunpack.c.h.b16 %v1421
    %v1848 = vunpack.c.l.b16 %v1422
    %v1849 = vunpack.c.h.b16 %v1422
    %v1850 = vunpack.c.l.b16 %v1423
    %v1851 = vunpack.c.h.b16 %v1423
    %v1852 = vunpack.c.l.b16 %v1424
    %v1853 = vunpack.c.h.b16 %v1424
    %v1854 = vunpack.c.l.b16 %v1425
    %v1855 = vunpack.c.h.b16 %v1425
    %v1856 = vunpack.c.l.b16 %v1426
    %v1857 = vunpack.c.h.b16 %v1426
    %v1858 = vunpack.c.l.b16 %v1427
    %v1859 = vunpack.c.h.b16 %v1427
    %v1860 = vpack.c.b16 %v1578, %v1572
    %v1861 = vpack.c.b16 %v1579, %v1573
    %v1862 = vpack.c.b16 %v1580, %v1574
    %v1863 = vpack.c.b16 %v1581, %v1575
    %v1864 = vpack.c.b16 %v1582, %v1576
    %v1865 = vpack.c.b16 %v1583, %v1577
    %v1866 = vpack.c.b16 %v1590, %v1584
    %v1867 = vpack.c.b16 %v1591, %v1585
    %v1868 = vpack.c.b16 %v1592, %v1586
    %v1869 = vpack.c.b16 %v1593, %v1587
    %v1870 = vpack.c.b16 %v1594, %v1588
    %v1871 = vpack.c.b16 %v1595, %v1589
    %v1872 = vpack.c.b16 %v1602, %v1596
    %v1873 = vpack.c.b16 %v1603, %v1597
    %v1874 = vpack.c.b16 %v1604, %v1598
    %v1875 = vpack.c.b16 %v1605, %v1599
    %v1876 = vpack.c.b16 %v1606, %v1600
    %v1877 = vpack.c.b16 %v1607, %v1601
    %v1878 = vpack.c.b16 %v1614, %v1608
    %v1879 = vpack.c.b16 %v1615, %v1609
    %v1880 = vpack.c.b16 %v1616, %v1610
    %v1881 = vpack.c.b16 %v1617, %v1611
    %v1882 = vpack.c.b16 %v1618, %v1612
    %v1883 = vpack.c.b16 %v1619, %v1613
    %v1884 = vpack.c.b16 %v1626, %v1620
    %v1885 = vpack.c.b16 %v1627, %v1621
    %v1886 = vpack.c.b16 %v1628, %v1622
    %v1887 = vpack.c.b16 %v1629, %v1623
    %v1888 = vpack.c.b16 %v1630, %v1624
    %v1889 = vpack.c.b16 %v1631, %v1625
    %v1890 = vpack.c.b16 %v1638, %v1632
    %v1891 = vpack.c.b16 %v1639, %v1633
    %v1892 = vpack.c.b16 %v1640, %v1634
    %v1893 = vpack.c.b16 %v1641, %v1635
    %v1894 = vpack.c.b16 %v1642, %v1636
    %v1895 = vpack.c.b16 %v1643, %v1637
    %v1896 = vpack.c.b16 %v1650, %v1644
    %v1897 = vpack.c.b16 %v1651, %v1645
    %v1898 = vpack.c.b16 %v1652, %v1646
    %v1899 = vpack.c.b16 %v1653, %v1647
    %v1900 = vpack.c.b16 %v1654, %v1648
    %v1901 = vpack.c.b16 %v1655, %v1649
    %v1902 = vpack.c.b16 %v1662, %v1656
    %v1903 = vpack.c.b16 %v1663, %v1657
    %v1904 = vpack.c.b16 %v1664, %v1658
    %v1905 = vpack.c.b16 %v1665, %v1659
    %v1906 = vpack.c.b16 %v1666, %v1660
    %v1907 = vpack.c.b16 %v1667, %v1661
    %v1908 = vpack.c.b16 %v1674, %v1668
    %v1909 = vpack.c.b16 %v1675, %v1669
    %v1910 = vpack.c.b16 %v1676, %v1670
    %v1911 = vpack.c.b16 %v1677, %v1671
    %v1912 = vpack.c.b16 %v1678, %v1672
    %v1913 = vpack.c.b16 %v1679, %v1673
    %v1914 = vpack.c.b16 %v1686, %v1680
    %v1915 = vpack.c.b16 %v1687, %v1681
    %v1916 = vpack.c.b16 %v1688, %v1682
    %v1917 = vpack.c.b16 %v1689, %v1683
    %v1918 = vpack.c.b16 %v1690, %v1684
    %v1919 = vpack.c.b16 %v1691, %v1685
    %v1920 = vpack.c.b16 %v1698, %v1692
    %v1921 = vpack.c.b16 %v1699, %v1693
    %v1922 = vpack.c.b16 %v1700, %v1694
    %v1923 = vpack.c.b16 %v1701, %v1695
    %v1924 = vpack.c.b16 %v1702, %v1696
    %v1925 = vpack.c.b16 %v1703, %v1697
    %v1926 = vpack.c.b16 %v1710, %v1704
    %v1927 = vpack.c.b16 %v1711, %v1705
    %v1928 = vpack.c.b16 %v1712, %v1706
    %v1929 = vpack.c.b16 %v1713, %v1707
    %v1930 = vpack.c.b16 %v1714, %v1708
    %v1931 = vpack.c.b16 %v1715, %v1709
    %v1932 = vpack.c.b16 %v1722, %v1716
    %v1933 = vpack.c.b16 %v1723, %v1717
    %v1934 = vpack.c.b16 %v1724, %v1718
    %v1935 = vpack.c.b16 %v1725, %v1719
    %v1936 = vpack.c.b16 %v1726, %v1720
    %v1937 = vpack.c.b16 %v1727, %v1721
    %v1938 = vpack.c.b16 %v1734, %v1728
    %v1939 = vpack.c.b16 %v1735, %v1729
    %v1940 = vpack.c.b16 %v1736, %v1730
    %v1941 = vpack.c.b16 %v1737, %v1731
    %v1942 = vpack.c.b16 %v1738, %v1732
    %v1943 = vpack.c.b16 %v1739, %v1733
    %v1944 = vpack.c.b16 %v1746, %v1740
    %v1945 = vpack.c.b16 %v1747, %v1741
    %v1946 = vpack.c.b16 %v1748, %v1742
    %v1947 = vpack.c.b16 %v1749, %v1743
    %v1948 = vpack.c.b16 %v1750, %v1744
    %v1949 = vpack.c.b16 %v1751, %v1745
    %v1950 = vpack.c.b16 %v1758, %v1752
    %v1951 = vpack.c.b16 %v1759, %v1753
    %v1952 = vpack.c.b16 %v1760, %v1754
    %v1953 = vpack.c.b16 %v1761, %v1755
    %v1954 = vpack.c.b16 %v1762, %v1756
    %v1955 = vpack.c.b16 %v1763, %v1757
    %v1956 = vpack.c.b16 %v1770, %v1764
    %v1957 = vpack.c.b16 %v1771, %v1765
    %v1958 = vpack.c.b16 %v1772, %v1766
    %v1959 = vpack.c.b16 %v1773, %v1767
    %v1960 = vpack.c.b16 %v1774, %v1768
    %v1961 = vpack.c.b16 %v1775, %v1769
    %v1962 = vpack.c.b16 %v1782, %v1776
    %v1963 = vpack.c.b16 %v1783, %v1777
    %v1964 = vpack.c.b16 %v1784, %v1778
    %v1965 = vpack.c.b16 %v1785, %v1779
    %v1966 = vpack.c.b16 %v1786, %v1780
    %v1967 = vpack.c.b16 %v1787, %v1781
    %v1968 = vpack.c.b16 %v1794, %v1788
    %v1969 = vpack.c.b16 %v1795, %v1789
    %v1970 = vpack.c.b16 %v1796, %v1790
    %v1971 = vpack.c.b16 %v1797, %v1791
    %v1972 = vpack.c.b16 %v1798, %v1792
    %v1973 = vpack.c.b16 %v1799, %v1793
    %v1974 = vpack.c.b16 %v1806, %v1800
    %v1975 = vpack.c.b16 %v1807, %v1801
    %v1976 = vpack.c.b16 %v1808, %v1802
    %v1977 = vpack.c.b16 %v1809, %v1803
    %v1978 = vpack.c.b16 %v1810, %v1804
    %v1979 = vpack.c.b16 %v1811, %v1805
    %v1980 = vpack.c.b16 %v1818, %v1812
    %v1981 = vpack.c.b16 %v1819, %v1813
    %v1982 = vpack.c.b16 %v1820, %v1814
    %v1983 = vpack.c.b16 %v1821, %v1815
    %v1984 = vpack.c.b16 %v1822, %v1816
    %v1985 = vpack.c.b16 %v1823, %v1817
    %v1986 = vpack.c.b16 %v1830, %v1824
    %v1987 = vpack.c.b16 %v1831, %v1825
    %v1988 = vpack.c.b16 %v1832, %v1826
    %v1989 = vpack.c.b16 %v1833, %v1827
    %v1990 = vpack.c.b16 %v1834, %v1828
    %v1991 = vpack.c.b16 %v1835, %v1829
    %v1992 = vpack.c.b16 %v1842, %v1836
    %v1993 = vpack.c.b16 %v1843, %v1837
    %v1994 = vpack.c.b16 %v1844, %v1838
    %v1995 = vpack.c.b16 %v1845, %v1839
    %v1996 = vpack.c.b16 %v1846, %v1840
    %v1997 = vpack.c.b16 %v1847, %v1841
    %v1998 = vpack.c.b16 %v1854, %v1848
    %v1999 = vpack.c.b16 %v1855, %v1849
    %v2000 = vpack.c.b16 %v1856, %v1850
    %v2001 = vpack.c.b16 %v1857, %v1851
    %v2002 = vpack.c.b16 %v1858, %v1852
    %v2003 = vpack.c.b16 %v1859, %v1853
    %2148 = vmatpush.bf16.msra.mxu0 %v1902
    %2149 = vmatpush.bf16.msra.mxu0 %v1896
    %2150 = vmatpush.bf16.msra.mxu0 %v1890
    %2151 = vmatpush.bf16.msra.mxu0 %v1884
    %2152 = vmatpush.bf16.msra.mxu0 %v1878
    %2153 = vmatpush.bf16.msra.mxu0 %v1872
    %2154 = vmatpush.bf16.msra.mxu0 %v1866
    %2155 = vmatpush.bf16.msra.mxu0 %v1860
    %2156 = vmatmul.bf16.gmra.mxu0 %v1281
    %v2157 = vpop.f32.mrf.mxu0
    %v2158 = vadd.f32 0.0, %v2157
    %v2159 = vpop.f32.mrf.mxu0
    %2160 = vdwg.mxu0
    %2161 = vmatpush.bf16.msra.mxu0 %v1950
    %2162 = vmatpush.bf16.msra.mxu0 %v1944
    %2163 = vmatpush.bf16.msra.mxu0 %v1938
    %2164 = vmatpush.bf16.msra.mxu0 %v1932
    %2165 = vmatpush.bf16.msra.mxu0 %v1926
    %2166 = vmatpush.bf16.msra.mxu0 %v1920
    %2167 = vmatpush.bf16.msra.mxu0 %v1914
    %2168 = vmatpush.bf16.msra.mxu0 %v1908
    %2169 = vmatmul.bf16.gmra.mxu0 %v1282
    %v2170 = vpop.f32.mrf.mxu0
    %v2171 = vadd.f32 %v2158, %v2170
    %v2172 = vpop.f32.mrf.mxu0
    %2173 = vdwg.mxu0
    %2174 = vmatpush.bf16.msra.mxu0 %v1998
    %2175 = vmatpush.bf16.msra.mxu0 %v1992
    %2176 = vmatpush.bf16.msra.mxu0 %v1986
    %2177 = vmatpush.bf16.msra.mxu0 %v1980
    %2178 = vmatpush.bf16.msra.mxu0 %v1974
    %2179 = vmatpush.bf16.msra.mxu0 %v1968
    %2180 = vmatpush.bf16.msra.mxu0 %v1962
    %2181 = vmatpush.bf16.msra.mxu0 %v1956
    %2182 = vmatmul.bf16.gmra.mxu0 %v1283
    %v2183 = vpop.f32.mrf.mxu0
    %v2184 = vadd.f32 %v2171, %v2183
    %v2185 = vpop.f32.mrf.mxu0
    %2186 = vdwg.mxu0
    %2187 = vmatpush.bf16.msra.mxu0 %v1903
    %2188 = vmatpush.bf16.msra.mxu0 %v1897
    %2189 = vmatpush.bf16.msra.mxu0 %v1891
    %2190 = vmatpush.bf16.msra.mxu0 %v1885
    %2191 = vmatpush.bf16.msra.mxu0 %v1879
    %2192 = vmatpush.bf16.msra.mxu0 %v1873
    %2193 = vmatpush.bf16.msra.mxu0 %v1867
    %2194 = vmatpush.bf16.msra.mxu0 %v1861
    %2195 = vmatmul.bf16.gmra.mxu0 %v1281
    %v2196 = vpop.f32.mrf.mxu0
    %v2197 = vadd.f32 0.0, %v2196
    %v2198 = vpop.f32.mrf.mxu0
    %2199 = vdwg.mxu0
    %2200 = vmatpush.bf16.msra.mxu0 %v1951
    %2201 = vmatpush.bf16.msra.mxu0 %v1945
    %2202 = vmatpush.bf16.msra.mxu0 %v1939
    %2203 = vmatpush.bf16.msra.mxu0 %v1933
    %2204 = vmatpush.bf16.msra.mxu0 %v1927
    %2205 = vmatpush.bf16.msra.mxu0 %v1921
    %2206 = vmatpush.bf16.msra.mxu0 %v1915
    %2207 = vmatpush.bf16.msra.mxu0 %v1909
    %2208 = vmatmul.bf16.gmra.mxu0 %v1282
    %v2209 = vpop.f32.mrf.mxu0
    %v2210 = vadd.f32 %v2197, %v2209
    %v2211 = vpop.f32.mrf.mxu0
    %2212 = vdwg.mxu0
    %2213 = vmatpush.bf16.msra.mxu0 %v1999
    %2214 = vmatpush.bf16.msra.mxu0 %v1993
    %2215 = vmatpush.bf16.msra.mxu0 %v1987
    %2216 = vmatpush.bf16.msra.mxu0 %v1981
    %2217 = vmatpush.bf16.msra.mxu0 %v1975
    %2218 = vmatpush.bf16.msra.mxu0 %v1969
    %2219 = vmatpush.bf16.msra.mxu0 %v1963
    %2220 = vmatpush.bf16.msra.mxu0 %v1957
    %2221 = vmatmul.bf16.gmra.mxu0 %v1283
    %v2222 = vpop.f32.mrf.mxu0
    %v2223 = vadd.f32 %v2210, %v2222
    %v2224 = vpop.f32.mrf.mxu0
    %2225 = vdwg.mxu0
    %2226 = vmatpush.bf16.msra.mxu0 %v1904
    %2227 = vmatpush.bf16.msra.mxu0 %v1898
    %2228 = vmatpush.bf16.msra.mxu0 %v1892
    %2229 = vmatpush.bf16.msra.mxu0 %v1886
    %2230 = vmatpush.bf16.msra.mxu0 %v1880
    %2231 = vmatpush.bf16.msra.mxu0 %v1874
    %2232 = vmatpush.bf16.msra.mxu0 %v1868
    %2233 = vmatpush.bf16.msra.mxu0 %v1862
    %2234 = vmatmul.bf16.gmra.mxu0 %v1281
    %v2235 = vpop.f32.mrf.mxu0
    %v2236 = vadd.f32 0.0, %v2235
    %v2237 = vpop.f32.mrf.mxu0
    %2238 = vdwg.mxu0
    %2239 = vmatpush.bf16.msra.mxu0 %v1952
    %2240 = vmatpush.bf16.msra.mxu0 %v1946
    %2241 = vmatpush.bf16.msra.mxu0 %v1940
    %2242 = vmatpush.bf16.msra.mxu0 %v1934
    %2243 = vmatpush.bf16.msra.mxu0 %v1928
    %2244 = vmatpush.bf16.msra.mxu0 %v1922
    %2245 = vmatpush.bf16.msra.mxu0 %v1916
    %2246 = vmatpush.bf16.msra.mxu0 %v1910
    %2247 = vmatmul.bf16.gmra.mxu0 %v1282
    %v2248 = vpop.f32.mrf.mxu0
    %v2249 = vadd.f32 %v2236, %v2248
    %v2250 = vpop.f32.mrf.mxu0
    %2251 = vdwg.mxu0
    %2252 = vmatpush.bf16.msra.mxu0 %v2000
    %2253 = vmatpush.bf16.msra.mxu0 %v1994
    %2254 = vmatpush.bf16.msra.mxu0 %v1988
    %2255 = vmatpush.bf16.msra.mxu0 %v1982
    %2256 = vmatpush.bf16.msra.mxu0 %v1976
    %2257 = vmatpush.bf16.msra.mxu0 %v1970
    %2258 = vmatpush.bf16.msra.mxu0 %v1964
    %2259 = vmatpush.bf16.msra.mxu0 %v1958
    %2260 = vmatmul.bf16.gmra.mxu0 %v1283
    %v2261 = vpop.f32.mrf.mxu0
    %v2262 = vadd.f32 %v2249, %v2261
    %v2263 = vpop.f32.mrf.mxu0
    %2264 = vdwg.mxu0
    %2265 = vmatpush.bf16.msra.mxu0 %v1905
    %2266 = vmatpush.bf16.msra.mxu0 %v1899
    %2267 = vmatpush.bf16.msra.mxu0 %v1893
    %2268 = vmatpush.bf16.msra.mxu0 %v1887
    %2269 = vmatpush.bf16.msra.mxu0 %v1881
    %2270 = vmatpush.bf16.msra.mxu0 %v1875
    %2271 = vmatpush.bf16.msra.mxu0 %v1869
    %2272 = vmatpush.bf16.msra.mxu0 %v1863
    %2273 = vmatmul.bf16.gmra.mxu0 %v1281
    %v2274 = vpop.f32.mrf.mxu0
    %v2275 = vadd.f32 0.0, %v2274
    %v2276 = vpop.f32.mrf.mxu0
    %2277 = vdwg.mxu0
    %2278 = vmatpush.bf16.msra.mxu0 %v1953
    %2279 = vmatpush.bf16.msra.mxu0 %v1947
    %2280 = vmatpush.bf16.msra.mxu0 %v1941
    %2281 = vmatpush.bf16.msra.mxu0 %v1935
    %2282 = vmatpush.bf16.msra.mxu0 %v1929
    %2283 = vmatpush.bf16.msra.mxu0 %v1923
    %2284 = vmatpush.bf16.msra.mxu0 %v1917
    %2285 = vmatpush.bf16.msra.mxu0 %v1911
    %2286 = vmatmul.bf16.gmra.mxu0 %v1282
    %v2287 = vpop.f32.mrf.mxu0
    %v2288 = vadd.f32 %v2275, %v2287
    %v2289 = vpop.f32.mrf.mxu0
    %2290 = vdwg.mxu0
    %2291 = vmatpush.bf16.msra.mxu0 %v2001
    %2292 = vmatpush.bf16.msra.mxu0 %v1995
    %2293 = vmatpush.bf16.msra.mxu0 %v1989
    %2294 = vmatpush.bf16.msra.mxu0 %v1983
    %2295 = vmatpush.bf16.msra.mxu0 %v1977
    %2296 = vmatpush.bf16.msra.mxu0 %v1971
    %2297 = vmatpush.bf16.msra.mxu0 %v1965
    %2298 = vmatpush.bf16.msra.mxu0 %v1959
    %2299 = vmatmul.bf16.gmra.mxu0 %v1283
    %v2300 = vpop.f32.mrf.mxu0
    %v2301 = vadd.f32 %v2288, %v2300
    %v2302 = vpop.f32.mrf.mxu0
    %2303 = vdwg.mxu0
    %2304 = vmatpush.bf16.msra.mxu0 %v1906
    %2305 = vmatpush.bf16.msra.mxu0 %v1900
    %2306 = vmatpush.bf16.msra.mxu0 %v1894
    %2307 = vmatpush.bf16.msra.mxu0 %v1888
    %2308 = vmatpush.bf16.msra.mxu0 %v1882
    %2309 = vmatpush.bf16.msra.mxu0 %v1876
    %2310 = vmatpush.bf16.msra.mxu0 %v1870
    %2311 = vmatpush.bf16.msra.mxu0 %v1864
    %2312 = vmatmul.bf16.gmra.mxu0 %v1281
    %v2313 = vpop.f32.mrf.mxu0
    %v2314 = vadd.f32 0.0, %v2313
    %v2315 = vpop.f32.mrf.mxu0
    %2316 = vdwg.mxu0
    %2317 = vmatpush.bf16.msra.mxu0 %v1954
    %2318 = vmatpush.bf16.msra.mxu0 %v1948
    %2319 = vmatpush.bf16.msra.mxu0 %v1942
    %2320 = vmatpush.bf16.msra.mxu0 %v1936
    %2321 = vmatpush.bf16.msra.mxu0 %v1930
    %2322 = vmatpush.bf16.msra.mxu0 %v1924
    %2323 = vmatpush.bf16.msra.mxu0 %v1918
    %2324 = vmatpush.bf16.msra.mxu0 %v1912
    %2325 = vmatmul.bf16.gmra.mxu0 %v1282
    %v2326 = vpop.f32.mrf.mxu0
    %v2327 = vadd.f32 %v2314, %v2326
    %v2328 = vpop.f32.mrf.mxu0
    %2329 = vdwg.mxu0
    %2330 = vmatpush.bf16.msra.mxu0 %v2002
    %2331 = vmatpush.bf16.msra.mxu0 %v1996
    %2332 = vmatpush.bf16.msra.mxu0 %v1990
    %2333 = vmatpush.bf16.msra.mxu0 %v1984
    %2334 = vmatpush.bf16.msra.mxu0 %v1978
    %2335 = vmatpush.bf16.msra.mxu0 %v1972
    %2336 = vmatpush.bf16.msra.mxu0 %v1966
    %2337 = vmatpush.bf16.msra.mxu0 %v1960
    %2338 = vmatmul.bf16.gmra.mxu0 %v1283
    %v2339 = vpop.f32.mrf.mxu0
    %v2340 = vadd.f32 %v2327, %v2339
    %v2341 = vpop.f32.mrf.mxu0
    %2342 = vdwg.mxu0
    %2343 = vmatpush.bf16.msra.mxu0 %v1907
    %2344 = vmatpush.bf16.msra.mxu0 %v1901
    %2345 = vmatpush.bf16.msra.mxu0 %v1895
    %2346 = vmatpush.bf16.msra.mxu0 %v1889
    %2347 = vmatpush.bf16.msra.mxu0 %v1883
    %2348 = vmatpush.bf16.msra.mxu0 %v1877
    %2349 = vmatpush.bf16.msra.mxu0 %v1871
    %2350 = vmatpush.bf16.msra.mxu0 %v1865
    %2351 = vmatmul.bf16.gmra.mxu0 %v1281
    %v2352 = vpop.f32.mrf.mxu0
    %v2353 = vadd.f32 0.0, %v2352
    %v2354 = vpop.f32.mrf.mxu0
    %2355 = vdwg.mxu0
    %2356 = vmatpush.bf16.msra.mxu0 %v1955
    %2357 = vmatpush.bf16.msra.mxu0 %v1949
    %2358 = vmatpush.bf16.msra.mxu0 %v1943
    %2359 = vmatpush.bf16.msra.mxu0 %v1937
    %2360 = vmatpush.bf16.msra.mxu0 %v1931
    %2361 = vmatpush.bf16.msra.mxu0 %v1925
    %2362 = vmatpush.bf16.msra.mxu0 %v1919
    %2363 = vmatpush.bf16.msra.mxu0 %v1913
    %2364 = vmatmul.bf16.gmra.mxu0 %v1282
    %v2365 = vpop.f32.mrf.mxu0
    %v2366 = vadd.f32 %v2353, %v2365
    %v2367 = vpop.f32.mrf.mxu0
    %2368 = vdwg.mxu0
    %2369 = vmatpush.bf16.msra.mxu0 %v2003
    %2370 = vmatpush.bf16.msra.mxu0 %v1997
    %2371 = vmatpush.bf16.msra.mxu0 %v1991
    %2372 = vmatpush.bf16.msra.mxu0 %v1985
    %2373 = vmatpush.bf16.msra.mxu0 %v1979
    %2374 = vmatpush.bf16.msra.mxu0 %v1973
    %2375 = vmatpush.bf16.msra.mxu0 %v1967
    %2376 = vmatpush.bf16.msra.mxu0 %v1961
    %2377 = vmatmul.bf16.gmra.mxu0 %v1283
    %v2378 = vpop.f32.mrf.mxu0
    %v2379 = vadd.f32 %v2366, %v2378
    %v2380 = vpop.f32.mrf.mxu0
    %2381 = vdwg.mxu0
    %v2382 = vmax.f32 %v2184, 0.0
    %v2383 = vmax.f32 %v2223, 0.0
    %v2384 = vmax.f32 %v2262, 0.0
    %v2385 = vmax.f32 %v2301, 0.0
    %v2386 = vmax.f32 %v2340, 0.0
    %v2387 = vmax.f32 %v2379, 0.0
    %2388 = vst [vmem:[#allocation8] sm:$0xff] %v2382
    %2389 = vst [vmem:[#allocation8 + $0x8] sm:$0xff] %v2383
    %2390 = vst [vmem:[#allocation8 + $0x10] sm:$0xff] %v2384
    %2391 = vst [vmem:[#allocation8 + $0x18] sm:$0xff] %v2385
    %2392 = vst [vmem:[#allocation8 + $0x20] sm:$0xff] %v2386
    %2393 = vst [vmem:[#allocation8 + $0x28] sm:$0xff] %v2387
    // Predicated region
    $region26: #{tpu_custom_call.1} parent=1 // pred_check
      _
    $region27: #{tpu_custom_call.1} parent=1 // pred_check_branch
      %2395 = sbr.rel (0) target = $region29
    $region28: #{tpu_custom_call.1} parent=1 // pred_region
      %2397 = vsyncadd [#allocation4], 0
      %s2399 = sshll.u32 [#allocation8], 4
      %s2400 = int_to_ptr.vmem [resolvable:$true] %s2399
      %s2401 = sshll.u32 %s3, 4
      %s2402 = int_to_ptr.hbm [resolvable:$true] %s2401
      %2404 = dma.vmem_to_hbm [thread:$0]  %s2400, 768, %s2402, [#allocation4]
    $region29: #{tpu_custom_call.1} parent=1 // pred_fallthru
      _
    // Predicated region
    $region30: #{tpu_custom_call.1} parent=1 // pred_check
      _
    $region31: #{tpu_custom_call.1} parent=1 // pred_check_branch
      %2406 = sbr.rel (0) target = $region33
    $region32: #{tpu_custom_call.1} parent=1 // pred_region
      %2408 = dma.done [#allocation4], 768
    $region33: #{tpu_custom_call.1} parent=1 // pred_fallthru
      _
    %2409 = vsyncpa [#allocation3], 1
    %2410 = vsyncpa [#allocation6], 1
    %2411 = vsyncpa [#allocation4], 1

</llo_original>
